<compile_context>
chip_gen: v5e
topology: v5e:2x2
jax: 0.10.0
libtpu: 0.0.40
codegen_flags: <defaults>
</compile_context>

<pallas_src>
import jax
import jax.numpy as jnp
from jax.experimental import pallas as pl
from jax.experimental.pallas import tpu as pltpu

STATE_SIZE = 4       # pooled length must be 2 to feed Linear(2, 1024)
ACTION_SIZE = 2
HIDDEN_C = 200       # Conv1d out_channels
H1 = 1024
H2 = 128
BN_EPS = 1e-5
POOL_STRIDE = 2

K_AUG = H1 + 8       # 1032: h1 rows + ones-row (b2 path) + zero pad to a sublane multiple
MXU_K = 128          # lane-padded contraction dim of the first (tiny) matmul
LANE_PAD = 256       # lane width of the small-params slab (>= HIDDEN_C, multiple of 128)


def critic_kernel(state_ref, slab_ref, w1aug_ref, w2aug_ref, out_ref):
    # state_ref : SMEM (4,)        f32   [s0, s1, s2, s3]
    # slab_ref  : VMEM (8, 256)    f32   rows: conv_w, conv_b, gamma, beta, w3, b3(bcast)
    # w1aug_ref : VMEM (1032, 128) bf16  rows j<1024: [w1[0,j], w1[1,j], b1[j], 0...];
    #                                    row 1024: [0, 0, 1, 0...] (ones-row generator)
    # w2aug_ref : VMEM (128, 1032) bf16  [w2^T | b2 | zeros]
    # out_ref   : VMEM (1, 200)    f32   lane-dense output row
    C = HIDDEN_C
    cw    = slab_ref[0:1, 0:C]
    cb    = slab_ref[1:2, 0:C]
    gamma = slab_ref[2:3, 0:C]
    beta  = slab_ref[3:4, 0:C]
    w3row = slab_ref[4:5, 0:H2]
    b3row = slab_ref[5:6, 0:C]

    # Conv1d(in=1, out=C, k=1), channel axis on lanes: conv_l = s_l * cw + cb per position.
    s0 = state_ref[0]
    s1 = state_ref[1]
    s2 = state_ref[2]
    s3 = state_ref[3]
    c0 = s0 * cw + cb
    c1 = s1 * cw + cb
    c2 = s2 * cw + cb
    c3 = s3 * cw + cb

    # BatchNorm1d(C), training mode: biased batch stats over the 4 positions, per lane.
    mean = (c0 + c1 + c2 + c3) * 0.25
    var = ((c0 - mean) ** 2 + (c1 - mean) ** 2
           + (c2 - mean) ** 2 + (c3 - mean) ** 2) * 0.25
    scale = jax.lax.rsqrt(var + BN_EPS) * gamma
    # MaxPool1d(kernel=1, stride=2) keeps positions 0 and 2 -> only normalize those rows.
    p0 = jnp.maximum((c0 - mean) * scale + beta, 0.0)    # (1, C)
    p1 = jnp.maximum((c2 - mean) * scale + beta, 0.0)    # (1, C)

    # Augmented pooled tile Paug (MXU_K, C): rows [p0, p1, ones, zeros...].
    rows = jax.lax.broadcasted_iota(jnp.int32, (MXU_K, C), 0)
    paug = jnp.where(rows == 0, p0,
           jnp.where(rows == 1, p1,
           jnp.where(rows == 2, 1.0, 0.0))).astype(jnp.bfloat16)

    # Linear(2, 1024) + b1 + ReLU on the MXU.  Row H1 of the result is exactly 1.0
    # (ones-row generator, survives ReLU and the bf16 cast), feeding b2 to the next matmul.
    h1 = jnp.dot(w1aug_ref[...], paug, preferred_element_type=jnp.float32)   # (K_AUG, C)
    h1 = jnp.maximum(h1, 0.0).astype(jnp.bfloat16)

    # Linear(1024, 128) + b2 (via ones row) + ReLU — main MXU matmul, f32 accumulation.
    h2 = jnp.dot(w2aug_ref[...], h1, preferred_element_type=jnp.float32)     # (H2, C)
    h2 = jnp.maximum(h2, 0.0)

    # Linear(128, 1): tiny M=1 f32 matmul (MXU is otherwise idle) + b3.
    q = jnp.dot(w3row, h2, preferred_element_type=jnp.float32)               # (1, C)
    out_ref[...] = q + b3row


def prepare_params(params):
    """One-time repack of PyTorch-style f32 params into lane-dense kernel slabs."""
    (cw, cb, gamma, beta, w1, b1, w2, b2, w3, b3) = params

    # Small-param slab (8, 256) f32: contiguous lane-dense DMA (~8 KiB).
    slab = jnp.zeros((8, LANE_PAD), jnp.float32)
    slab = slab.at[0, :HIDDEN_C].set(cw.reshape(-1))
    slab = slab.at[1, :HIDDEN_C].set(cb.reshape(-1))
    slab = slab.at[2, :HIDDEN_C].set(gamma.reshape(-1))
    slab = slab.at[3, :HIDDEN_C].set(beta.reshape(-1))
    slab = slab.at[4, :H2].set(w3.reshape(-1))
    slab = slab.at[5, :].set(b3.reshape(()))          # b3 broadcast along lanes

    # W1-aug (1032, 128) bf16: [w1^T | b1 | 0...] plus the ones-row generator.
    w1aug = jnp.zeros((K_AUG, MXU_K), jnp.float32)
    w1aug = w1aug.at[:H1, 0].set(w1[0, :])
    w1aug = w1aug.at[:H1, 1].set(w1[1, :])
    w1aug = w1aug.at[:H1, 2].set(b1.reshape(-1))
    w1aug = w1aug.at[H1, 2].set(1.0)                  # picks up Paug's ones row
    w1aug = w1aug.astype(jnp.bfloat16)

    # W2-aug (128, 1032) bf16: [w2^T | b2 | zeros] — b2 folded into the main matmul.
    w2aug = jnp.zeros((H2, K_AUG), jnp.float32)
    w2aug = w2aug.at[:, :H1].set(w2.T)
    w2aug = w2aug.at[:, H1].set(b2.reshape(-1))
    w2aug = w2aug.astype(jnp.bfloat16)

    return (slab, w1aug, w2aug)


@jax.jit
def critic_forward(state, action, packed_params):
    # The PyTorch module computes cat((state, action.t()), dim=1) and then overwrites it,
    # so `action` has no effect on the output -> the dead concat is dropped.
    # state.tolist()/torch.tensor([state]) only adds a leading batch dim of 1; handled by
    # the final reshape.
    del action
    assert state.shape == (1, STATE_SIZE), state.shape
    # Pooling keeps positions 0 and 2 and Linear(2, .) needs exactly 2 of them:
    assert STATE_SIZE == 4

    slab, w1aug, w2aug = packed_params
    state_vec = state.reshape(STATE_SIZE)             # (4,) -> SMEM scalars, no transpose

    vmem = pl.BlockSpec(memory_space=pltpu.MemorySpace.VMEM)
    smem = pl.BlockSpec(memory_space=pltpu.MemorySpace.SMEM)
    out = pl.pallas_call(
        critic_kernel,
        out_shape=jax.ShapeDtypeStruct((1, HIDDEN_C), jnp.float32),
        in_specs=[smem, vmem, vmem, vmem],
        out_specs=vmem,
    )(state_vec, slab, w1aug, w2aug)
    return out.reshape(1, HIDDEN_C, 1)                # matches torch output (1, 200, 1)


def init_params(key):
    # Deterministic synthetic init mirroring PyTorch default bounds U(-1/sqrt(fan_in), .).
    ks = jax.random.split(key, 8)
    u = lambda k, shape, bound: jax.random.uniform(k, shape, jnp.float32, -bound, bound)
    cw = u(ks[0], (HIDDEN_C, 1), 1.0)                 # Conv1d weight (200,1,1) squeezed
    cb = u(ks[1], (HIDDEN_C, 1), 1.0)
    gamma = jnp.ones((HIDDEN_C, 1), jnp.float32)      # BatchNorm affine init
    beta = jnp.zeros((HIDDEN_C, 1), jnp.float32)
    w1 = u(ks[2], (2, H1), 1.0 / (2 ** 0.5))
    b1 = u(ks[3], (1, H1), 1.0 / (2 ** 0.5))
    w2 = u(ks[4], (H1, H2), 1.0 / (H1 ** 0.5))
    b2 = u(ks[5], (1, H2), 1.0 / (H1 ** 0.5))
    w3 = u(ks[6], (H2, 1), 1.0 / (H2 ** 0.5))
    b3 = u(ks[7], (1, 1), 1.0 / (H2 ** 0.5))
    return (cw, cb, gamma, beta, w1, b1, w2, b2, w3, b3)


def reference_forward(state, action, params):
    # Pure-JAX f32 reference with identical semantics (original orientation).
    del action
    (cw, cb, gamma, beta, w1, b1, w2, b2, w3, b3) = params
    conv = cw * state + cb                                           # (200, 4)
    mean = jnp.mean(conv, axis=1, keepdims=True)
    var = jnp.mean((conv - mean) ** 2, axis=1, keepdims=True)        # biased (training BN)
    h = jnp.maximum((conv - mean) / jnp.sqrt(var + BN_EPS) * gamma + beta, 0.0)
    pooled = h[:, ::POOL_STRIDE]                                     # (200, 2)
    h1 = jnp.maximum(pooled @ w1 + b1, 0.0)
    h2 = jnp.maximum(h1 @ w2 + b2, 0.0)
    return (h2 @ w3 + b3).reshape(1, HIDDEN_C, 1)


if __name__ == "__main__":
    key = jax.random.PRNGKey(0)
    kp, ks, ka = jax.random.split(key, 3)
    params = init_params(kp)
    packed = prepare_params(params)
    # Conv1d in_channels=1 forces state batch = 1; state_size=4 so pooled length = 2.
    state = jax.random.normal(ks, (1, STATE_SIZE), jnp.float32)
    action = jax.random.normal(ka, (ACTION_SIZE, 1), jnp.float32)    # action.t() -> (1, 2)

    out = jax.block_until_ready(critic_forward(state, action, packed))
    ref = reference_forward(state, action, params)

    assert out.shape == (1, HIDDEN_C, 1), out.shape
    # w1/w2/p/h1 are bf16 inside the kernel (f32 MXU accumulation) -> loosened tolerance.
    assert jnp.allclose(out, ref, atol=2e-2, rtol=2e-2), float(jnp.max(jnp.abs(out - ref)))
    print("KERNEL_OK")
</pallas_src>

<mosaic_0001>
module attributes {stable_mosaic.version = 11 : i64} {
  func.func @critic_kernel(%arg0: memref<4xf32, #tpu.memory_space<smem>>, %arg1: memref<8x256xf32, #tpu.memory_space<vmem>>, %arg2: memref<1032x128xbf16, #tpu.memory_space<vmem>>, %arg3: memref<128x1032xbf16, #tpu.memory_space<vmem>>, %arg4: memref<1x200xf32, #tpu.memory_space<vmem>>) attributes {dimension_semantics = [], scalar_prefetch = 0 : i64, scratch_operands = 0 : i64, tpu.core_type = #tpu.core_type<tc>} {
    %c0 = arith.constant 0 : index
    %c0_0 = arith.constant 0 : index
    %0 = vector.load %arg1[%c0, %c0_0] : memref<8x256xf32, #tpu.memory_space<vmem>>, vector<1x200xf32>
    %c1 = arith.constant 1 : index
    %c0_1 = arith.constant 0 : index
    %1 = vector.load %arg1[%c1, %c0_1] : memref<8x256xf32, #tpu.memory_space<vmem>>, vector<1x200xf32>
    %c2 = arith.constant 2 : index
    %c0_2 = arith.constant 0 : index
    %2 = vector.load %arg1[%c2, %c0_2] : memref<8x256xf32, #tpu.memory_space<vmem>>, vector<1x200xf32>
    %c3 = arith.constant 3 : index
    %c0_3 = arith.constant 0 : index
    %3 = vector.load %arg1[%c3, %c0_3] : memref<8x256xf32, #tpu.memory_space<vmem>>, vector<1x200xf32>
    %c4 = arith.constant 4 : index
    %c0_4 = arith.constant 0 : index
    %4 = vector.load %arg1[%c4, %c0_4] : memref<8x256xf32, #tpu.memory_space<vmem>>, vector<1x128xf32>
    %c5 = arith.constant 5 : index
    %c0_5 = arith.constant 0 : index
    %5 = vector.load %arg1[%c5, %c0_5] : memref<8x256xf32, #tpu.memory_space<vmem>>, vector<1x200xf32>
    %c0_6 = arith.constant 0 : index
    %6 = memref.load %arg0[%c0_6] : memref<4xf32, #tpu.memory_space<smem>>
    %c1_7 = arith.constant 1 : index
    %7 = memref.load %arg0[%c1_7] : memref<4xf32, #tpu.memory_space<smem>>
    %c2_8 = arith.constant 2 : index
    %8 = memref.load %arg0[%c2_8] : memref<4xf32, #tpu.memory_space<smem>>
    %c3_9 = arith.constant 3 : index
    %9 = memref.load %arg0[%c3_9] : memref<4xf32, #tpu.memory_space<smem>>
    %10 = vector.broadcast %6 : f32 to vector<1x200xf32>
    %11 = arith.mulf %10, %0 : vector<1x200xf32>
    %12 = arith.addf %11, %1 : vector<1x200xf32>
    %13 = vector.broadcast %7 : f32 to vector<1x200xf32>
    %14 = arith.mulf %13, %0 : vector<1x200xf32>
    %15 = arith.addf %14, %1 : vector<1x200xf32>
    %16 = vector.broadcast %8 : f32 to vector<1x200xf32>
    %17 = arith.mulf %16, %0 : vector<1x200xf32>
    %18 = arith.addf %17, %1 : vector<1x200xf32>
    %19 = vector.broadcast %9 : f32 to vector<1x200xf32>
    %20 = arith.mulf %19, %0 : vector<1x200xf32>
    %21 = arith.addf %20, %1 : vector<1x200xf32>
    %22 = arith.addf %12, %15 : vector<1x200xf32>
    %23 = arith.addf %22, %18 : vector<1x200xf32>
    %24 = arith.addf %23, %21 : vector<1x200xf32>
    %cst = arith.constant 2.500000e-01 : f32
    %25 = vector.broadcast %cst : f32 to vector<1x200xf32>
    %26 = arith.mulf %24, %25 : vector<1x200xf32>
    %27 = arith.subf %12, %26 : vector<1x200xf32>
    %28 = arith.mulf %27, %27 : vector<1x200xf32>
    %29 = arith.subf %15, %26 : vector<1x200xf32>
    %30 = arith.mulf %29, %29 : vector<1x200xf32>
    %31 = arith.addf %28, %30 : vector<1x200xf32>
    %32 = arith.subf %18, %26 : vector<1x200xf32>
    %33 = arith.mulf %32, %32 : vector<1x200xf32>
    %34 = arith.addf %31, %33 : vector<1x200xf32>
    %35 = arith.subf %21, %26 : vector<1x200xf32>
    %36 = arith.mulf %35, %35 : vector<1x200xf32>
    %37 = arith.addf %34, %36 : vector<1x200xf32>
    %cst_10 = arith.constant 2.500000e-01 : f32
    %38 = vector.broadcast %cst_10 : f32 to vector<1x200xf32>
    %39 = arith.mulf %37, %38 : vector<1x200xf32>
    %cst_11 = arith.constant 9.99999974E-6 : f32
    %40 = vector.broadcast %cst_11 : f32 to vector<1x200xf32>
    %41 = arith.addf %39, %40 : vector<1x200xf32>
    %42 = math.rsqrt %41 : vector<1x200xf32>
    %43 = arith.mulf %42, %2 : vector<1x200xf32>
    %44 = arith.subf %12, %26 : vector<1x200xf32>
    %45 = arith.mulf %44, %43 : vector<1x200xf32>
    %46 = arith.addf %45, %3 : vector<1x200xf32>
    %cst_12 = arith.constant 0.000000e+00 : f32
    %47 = vector.broadcast %cst_12 : f32 to vector<1x200xf32>
    %48 = arith.maximumf %46, %47 : vector<1x200xf32>
    %49 = arith.subf %18, %26 : vector<1x200xf32>
    %50 = arith.mulf %49, %43 : vector<1x200xf32>
    %51 = arith.addf %50, %3 : vector<1x200xf32>
    %cst_13 = arith.constant 0.000000e+00 : f32
    %52 = vector.broadcast %cst_13 : f32 to vector<1x200xf32>
    %53 = arith.maximumf %51, %52 : vector<1x200xf32>
    %54 = tpu.iota {dimensions = array<i32: 0>} : vector<128x200xi32>
    %c0_i32 = arith.constant 0 : i32
    %55 = vector.broadcast %c0_i32 : i32 to vector<128x200xi32>
    %56 = arith.cmpi eq, %54, %55 : vector<128x200xi32>
    %c1_i32 = arith.constant 1 : i32
    %57 = vector.broadcast %c1_i32 : i32 to vector<128x200xi32>
    %58 = arith.cmpi eq, %54, %57 : vector<128x200xi32>
    %c2_i32 = arith.constant 2 : i32
    %59 = vector.broadcast %c2_i32 : i32 to vector<128x200xi32>
    %60 = arith.cmpi eq, %54, %59 : vector<128x200xi32>
    %cst_14 = arith.constant 1.000000e+00 : f32
    %cst_15 = arith.constant 0.000000e+00 : f32
    %61 = vector.broadcast %cst_14 : f32 to vector<128x200xf32>
    %62 = vector.broadcast %cst_15 : f32 to vector<128x200xf32>
    %63 = arith.select %60, %61, %62 : vector<128x200xi1>, vector<128x200xf32>
    %64 = vector.shape_cast %53 : vector<1x200xf32> to vector<1x200xf32>
    %65 = vector.broadcast %64 : vector<1x200xf32> to vector<128x200xf32>
    %66 = arith.select %58, %65, %63 : vector<128x200xi1>, vector<128x200xf32>
    %67 = vector.shape_cast %48 : vector<1x200xf32> to vector<1x200xf32>
    %68 = vector.broadcast %67 : vector<1x200xf32> to vector<128x200xf32>
    %69 = arith.select %56, %68, %66 : vector<128x200xi1>, vector<128x200xf32>
    %70 = arith.truncf %69 : vector<128x200xf32> to vector<128x200xbf16>
    %c0_16 = arith.constant 0 : index
    %c0_17 = arith.constant 0 : index
    %71 = vector.load %arg2[%c0_16, %c0_17] : memref<1032x128xbf16, #tpu.memory_space<vmem>>, vector<1032x128xbf16>
    %cst_18 = arith.constant dense<0.000000e+00> : vector<1032x200xf32>
    %72 = tpu.matmul %71, %70, %cst_18 {dimension_numbers = #tpu.dot_dimension_numbers<[1], [0], [0], [1], [0, 0, 1, 1], [], []>} : vector<1032x128xbf16>, vector<128x200xbf16>, vector<1032x200xf32> -> vector<1032x200xf32>
    %cst_19 = arith.constant 0.000000e+00 : f32
    %73 = vector.broadcast %cst_19 : f32 to vector<1032x200xf32>
    %74 = arith.maximumf %72, %73 : vector<1032x200xf32>
    %75 = arith.truncf %74 : vector<1032x200xf32> to vector<1032x200xbf16>
    %c0_20 = arith.constant 0 : index
    %c0_21 = arith.constant 0 : index
    %76 = vector.load %arg3[%c0_20, %c0_21] : memref<128x1032xbf16, #tpu.memory_space<vmem>>, vector<128x1032xbf16>
    %cst_22 = arith.constant dense<0.000000e+00> : vector<128x200xf32>
    %77 = tpu.matmul %76, %75, %cst_22 {dimension_numbers = #tpu.dot_dimension_numbers<[1], [0], [0], [1], [0, 0, 1, 1], [], []>} : vector<128x1032xbf16>, vector<1032x200xbf16>, vector<128x200xf32> -> vector<128x200xf32>
    %cst_23 = arith.constant 0.000000e+00 : f32
    %78 = vector.broadcast %cst_23 : f32 to vector<128x200xf32>
    %79 = arith.maximumf %77, %78 : vector<128x200xf32>
    %cst_24 = arith.constant dense<0.000000e+00> : vector<1x200xf32>
    %80 = tpu.matmul %4, %79, %cst_24 {dimension_numbers = #tpu.dot_dimension_numbers<[1], [0], [0], [1], [0, 0, 1, 1], [], []>} : vector<1x128xf32>, vector<128x200xf32>, vector<1x200xf32> -> vector<1x200xf32>
    %81 = arith.addf %80, %5 : vector<1x200xf32>
    %c0_25 = arith.constant 0 : index
    %c0_26 = arith.constant 0 : index
    %82 = vector.load %arg4[%c0_25, %c0_26] : memref<1x200xf32, #tpu.memory_space<vmem>>, vector<1x200xf32>
    tpu.vector_store %arg4[%c0_25, %c0_26], %81 {strides = array<i32>} : memref<1x200xf32, #tpu.memory_space<vmem>>, vector<1x200xf32>,
    return
  }
}

</mosaic_0001>

<llo_original>
// kernel: critic_forward.1
$region0: #{critic_forward.1}
  #allocation0 [shape = 'u32[]', space=smem, size = 0x4, offset = 0x4, fixed_abs, tag = 'smem constant byte address 0x4 - core index']
  #allocation1 [shape = 'u32[72,128]{1,0:T(1,128)}', space=vmem, size = 0x9000, scoped, tag = 'internal scratch']
  %s0 = inlined_call_operand.vmem [shape: f32[4], index: 0, kind: input, shape index: {}]
  %s1 = inlined_call_operand.vmem [shape: f32[8,256], index: 1, kind: input, shape index: {}]
  %s2 = inlined_call_operand.vmem [shape: bf16[1032,128], index: 2, kind: input, shape index: {}]
  %s3 = inlined_call_operand.vmem [shape: bf16[128,1032], index: 3, kind: input, shape index: {}]
  %s4 = inlined_call_operand.hbm [shape: f32[1,200], index: 4, kind: output, shape index: {}]
  %s5 = sld [smem:[#allocation0]]
  $region30: #{critic_forward.1} parent=0
    _
  %s7 = ssub.s32 1, %s5
  %s8 = scalar_select 0, %s7, %s5
  $region1: #{critic_forward.1} parent=0
    #allocation2 [shape = 'u8[512]{0}', space=smem, size = 0x200, scoped, tag = 'input window, operand 0, single buffered']
    #allocation3 [shape = 's32[1]{0}', space=sflag, size = 0x4, scoped, tag = 'scoped memory for critic_forward.1']
    #allocation4 [shape = 's32[1]{0}', space=sflag, size = 0x4, scoped, tag = 'scoped memory for critic_forward.1']
    #allocation5 [shape = 'u8[1024]{0}', space=vmem, size = 0x400, scoped, tag = 'output window, operand 0, single buffered']
    %9 = vsyncpa [#allocation4], 0
    %10 = vsyncpa [#allocation3], 0
    // Predicated region
    $region2: #{critic_forward.1} parent=1 // pred_check
      _
    $region3: #{critic_forward.1} parent=1 // pred_check_branch
      %12 = sbr.rel (0) target = $region5
    $region4: #{critic_forward.1} parent=1 // pred_region
      %14 = vsyncadd [#allocation4], 0
      %s16 = sshll.u32 %s0, 4
      %s17 = int_to_ptr.vmem [resolvable:$true] %s16
      %19 = dma.vmem_to_smem %s17, 16, [#allocation2], [#allocation4]
    $region5: #{critic_forward.1} parent=1 // pred_fallthru
      _
    // Predicated region
    $region6: #{critic_forward.1} parent=1 // pred_check
      _
    $region7: #{critic_forward.1} parent=1 // pred_check_branch
      %21 = sbr.rel (0) target = $region9
    $region8: #{critic_forward.1} parent=1 // pred_region
      _
    $region9: #{critic_forward.1} parent=1 // pred_fallthru
      _
    // Predicated region
    $region10: #{critic_forward.1} parent=1 // pred_check
      _
    $region11: #{critic_forward.1} parent=1 // pred_check_branch
      %23 = sbr.rel (0) target = $region13
    $region12: #{critic_forward.1} parent=1 // pred_region
      _
    $region13: #{critic_forward.1} parent=1 // pred_fallthru
      _
    // Predicated region
    $region14: #{critic_forward.1} parent=1 // pred_check
      _
    $region15: #{critic_forward.1} parent=1 // pred_check_branch
      %25 = sbr.rel (0) target = $region17
    $region16: #{critic_forward.1} parent=1 // pred_region
      _
    $region17: #{critic_forward.1} parent=1 // pred_fallthru
      _
    // Predicated region
    $region18: #{critic_forward.1} parent=1 // pred_check
      _
    $region19: #{critic_forward.1} parent=1 // pred_check_branch
      %27 = sbr.rel (0) target = $region21
    $region20: #{critic_forward.1} parent=1 // pred_region
      %29 = dma.done [#allocation4], 16
    $region21: #{critic_forward.1} parent=1 // pred_fallthru
      _
    %30 = sfence
    %v32 = vld [vmem:[%s1] ss:$8 sm:$0x3]
    %s33 = scalar_lea.vmem %s1, 1
    %v34 = vld [vmem:[%s33] ss:$8 sm:$0x3]
    %s35 = scalar_lea.vmem %s1, 2
    %v36 = vld [vmem:[%s35] ss:$8 sm:$0x3]
    %s37 = scalar_lea.vmem %s1, 3
    %v38 = vld [vmem:[%s37] ss:$8 sm:$0x3]
    %v39 = vld [vmem:[%s1 + $0x4] ss:$0 sm:$0xff]
    %s40 = scalar_lea.vmem %s1, 5
    %v41 = vld [vmem:[%s40] ss:$8 sm:$0x3]
    %s42 = sld [smem:[#allocation2]]
    %s43 = sld [smem:[#allocation2 + $0x1]]
    %s44 = sld [smem:[#allocation2 + $0x2]]
    %s45 = sld [smem:[#allocation2 + $0x3]]
    %v46 = vstv %s42
    %v47 = vmul.f32 %v46, %v32
    %v48 = vadd.f32 %v47, %v34
    %v49 = vstv %s43
    %v50 = vmul.f32 %v49, %v32
    %v51 = vadd.f32 %v50, %v34
    %v52 = vstv %s44
    %v53 = vmul.f32 %v52, %v32
    %v54 = vadd.f32 %v53, %v34
    %v55 = vstv %s45
    %v56 = vmul.f32 %v55, %v32
    %v57 = vadd.f32 %v56, %v34
    %v58 = vadd.f32 %v48, %v51
    %v59 = vadd.f32 %v58, %v54
    %v60 = vadd.f32 %v59, %v57
    %v61 = vmul.f32 %v60, 0.25
    %v62 = vsub.f32 %v48, %v61
    %v63 = vmul.f32 %v62, %v62
    %v64 = vsub.f32 %v51, %v61
    %v65 = vmul.f32 %v64, %v64
    %v66 = vadd.f32 %v63, %v65
    %v67 = vsub.f32 %v54, %v61
    %v68 = vmul.f32 %v67, %v67
    %v69 = vadd.f32 %v66, %v68
    %v70 = vsub.f32 %v57, %v61
    %v71 = vmul.f32 %v70, %v70
    %v72 = vadd.f32 %v69, %v71
    %v73 = vmul.f32 %v72, 0.25
    %v74 = vadd.f32 %v73, 1e-05
    %v75 = vrsqrt.pop %v74
    %v76 = vmul.f32 %v75, %v74
    %v77 = vmul.f32 %v76, %v75
    %v78 = vmul.f32 0.5, %v77
    %v79 = vsub.f32 1.5, %v78
    %v80 = vmul.f32 %v75, %v79
    %vm81 = vweird.f32 %v74
    %vm82 = vweird.f32 %v75
    %vm83 = vmor %vm81, %vm82
    %v84 = vsel %vm83, %v75, %v80
    %v85 = vmul.f32 %v84, %v36
    %v86 = vmul.f32 %v62, %v85
    %v87 = vadd.f32 %v86, %v38
    %v88 = vmax.f32 %v87, 0.0
    %v89 = vmul.f32 %v67, %v85
    %v90 = vadd.f32 %v89, %v38
    %v91 = vmax.f32 %v90, 0.0
    %v92 = vlaneseq
    %v93 = vshrl.u32 %v92, 7
    %v94 = vadd.s32 %v93, 8
    %v95 = vadd.s32 %v93, 16
    %v96 = vadd.s32 %v93, 24
    %v97 = vadd.s32 %v93, 32
    %v98 = vadd.s32 %v93, 40
    %v99 = vadd.s32 %v93, 48
    %v100 = vadd.s32 %v93, 56
    %v101 = vadd.s32 %v93, 64
    %v102 = vadd.s32 %v93, 72
    %v103 = vadd.s32 %v93, 80
    %v104 = vadd.s32 %v93, 88
    %v105 = vadd.s32 %v93, 96
    %v106 = vadd.s32 %v93, 104
    %v107 = vadd.s32 %v93, 112
    %v108 = vadd.s32 %v93, 120
    %vm109 = vcmp.eq.s32.totalorder %v93, 0
    %vm110 = vcmp.eq.s32.totalorder %v94, 0
    %vm111 = vcmp.eq.s32.totalorder %v95, 0
    %vm112 = vcmp.eq.s32.totalorder %v96, 0
    %vm113 = vcmp.eq.s32.totalorder %v97, 0
    %vm114 = vcmp.eq.s32.totalorder %v98, 0
    %vm115 = vcmp.eq.s32.totalorder %v99, 0
    %vm116 = vcmp.eq.s32.totalorder %v100, 0
    %vm117 = vcmp.eq.s32.totalorder %v101, 0
    %vm118 = vcmp.eq.s32.totalorder %v102, 0
    %vm119 = vcmp.eq.s32.totalorder %v103, 0
    %vm120 = vcmp.eq.s32.totalorder %v104, 0
    %vm121 = vcmp.eq.s32.totalorder %v105, 0
    %vm122 = vcmp.eq.s32.totalorder %v106, 0
    %vm123 = vcmp.eq.s32.totalorder %v107, 0
    %vm124 = vcmp.eq.s32.totalorder %v108, 0
    %vm125 = vcmp.eq.s32.totalorder %v93, 1
    %vm126 = vcmp.eq.s32.totalorder %v94, 1
    %vm127 = vcmp.eq.s32.totalorder %v95, 1
    %vm128 = vcmp.eq.s32.totalorder %v96, 1
    %vm129 = vcmp.eq.s32.totalorder %v97, 1
    %vm130 = vcmp.eq.s32.totalorder %v98, 1
    %vm131 = vcmp.eq.s32.totalorder %v99, 1
    %vm132 = vcmp.eq.s32.totalorder %v100, 1
    %vm133 = vcmp.eq.s32.totalorder %v101, 1
    %vm134 = vcmp.eq.s32.totalorder %v102, 1
    %vm135 = vcmp.eq.s32.totalorder %v103, 1
    %vm136 = vcmp.eq.s32.totalorder %v104, 1
    %vm137 = vcmp.eq.s32.totalorder %v105, 1
    %vm138 = vcmp.eq.s32.totalorder %v106, 1
    %vm139 = vcmp.eq.s32.totalorder %v107, 1
    %vm140 = vcmp.eq.s32.totalorder %v108, 1
    %vm141 = vcmp.eq.s32.totalorder %v93, 2
    %vm142 = vcmp.eq.s32.totalorder %v94, 2
    %vm143 = vcmp.eq.s32.totalorder %v95, 2
    %vm144 = vcmp.eq.s32.totalorder %v96, 2
    %vm145 = vcmp.eq.s32.totalorder %v97, 2
    %vm146 = vcmp.eq.s32.totalorder %v98, 2
    %vm147 = vcmp.eq.s32.totalorder %v99, 2
    %vm148 = vcmp.eq.s32.totalorder %v100, 2
    %vm149 = vcmp.eq.s32.totalorder %v101, 2
    %vm150 = vcmp.eq.s32.totalorder %v102, 2
    %vm151 = vcmp.eq.s32.totalorder %v103, 2
    %vm152 = vcmp.eq.s32.totalorder %v104, 2
    %vm153 = vcmp.eq.s32.totalorder %v105, 2
    %vm154 = vcmp.eq.s32.totalorder %v106, 2
    %vm155 = vcmp.eq.s32.totalorder %v107, 2
    %vm156 = vcmp.eq.s32.totalorder %v108, 2
    %v157 = vsel %vm141, 1.0, 0.0
    %v158 = vsel %vm142, 1.0, 0.0
    %v159 = vsel %vm143, 1.0, 0.0
    %v160 = vsel %vm144, 1.0, 0.0
    %v161 = vsel %vm145, 1.0, 0.0
    %v162 = vsel %vm146, 1.0, 0.0
    %v163 = vsel %vm147, 1.0, 0.0
    %v164 = vsel %vm148, 1.0, 0.0
    %v165 = vsel %vm149, 1.0, 0.0
    %v166 = vsel %vm150, 1.0, 0.0
    %v167 = vsel %vm151, 1.0, 0.0
    %v168 = vsel %vm152, 1.0, 0.0
    %v169 = vsel %vm153, 1.0, 0.0
    %v170 = vsel %vm154, 1.0, 0.0
    %v171 = vsel %vm155, 1.0, 0.0
    %v172 = vsel %vm156, 1.0, 0.0
    %v174 = vperm.slane %v91, 0
    %v175 = vperm.slane %v91, 1
    %v178 = vsel %vm125, %v174, %v157
    %v179 = vsel %vm125, %v175, %v157
    %v180 = vsel %vm126, %v174, %v158
    %v181 = vsel %vm126, %v175, %v158
    %v182 = vsel %vm127, %v174, %v159
    %v183 = vsel %vm127, %v175, %v159
    %v184 = vsel %vm128, %v174, %v160
    %v185 = vsel %vm128, %v175, %v160
    %v186 = vsel %vm129, %v174, %v161
    %v187 = vsel %vm129, %v175, %v161
    %v188 = vsel %vm130, %v174, %v162
    %v189 = vsel %vm130, %v175, %v162
    %v190 = vsel %vm131, %v174, %v163
    %v191 = vsel %vm131, %v175, %v163
    %v192 = vsel %vm132, %v174, %v164
    %v193 = vsel %vm132, %v175, %v164
    %v194 = vsel %vm133, %v174, %v165
    %v195 = vsel %vm133, %v175, %v165
    %v196 = vsel %vm134, %v174, %v166
    %v197 = vsel %vm134, %v175, %v166
    %v198 = vsel %vm135, %v174, %v167
    %v199 = vsel %vm135, %v175, %v167
    %v200 = vsel %vm136, %v174, %v168
    %v201 = vsel %vm136, %v175, %v168
    %v202 = vsel %vm137, %v174, %v169
    %v203 = vsel %vm137, %v175, %v169
    %v204 = vsel %vm138, %v174, %v170
    %v205 = vsel %vm138, %v175, %v170
    %v206 = vsel %vm139, %v174, %v171
    %v207 = vsel %vm139, %v175, %v171
    %v208 = vsel %vm140, %v174, %v172
    %v209 = vsel %vm140, %v175, %v172
    %v211 = vperm.slane %v88, 0
    %v212 = vperm.slane %v88, 1
    %v215 = vsel %vm109, %v211, %v178
    %v216 = vsel %vm109, %v212, %v179
    %v217 = vsel %vm110, %v211, %v180
    %v218 = vsel %vm110, %v212, %v181
    %v219 = vsel %vm111, %v211, %v182
    %v220 = vsel %vm111, %v212, %v183
    %v221 = vsel %vm112, %v211, %v184
    %v222 = vsel %vm112, %v212, %v185
    %v223 = vsel %vm113, %v211, %v186
    %v224 = vsel %vm113, %v212, %v187
    %v225 = vsel %vm114, %v211, %v188
    %v226 = vsel %vm114, %v212, %v189
    %v227 = vsel %vm115, %v211, %v190
    %v228 = vsel %vm115, %v212, %v191
    %v229 = vsel %vm116, %v211, %v192
    %v230 = vsel %vm116, %v212, %v193
    %v231 = vsel %vm117, %v211, %v194
    %v232 = vsel %vm117, %v212, %v195
    %v233 = vsel %vm118, %v211, %v196
    %v234 = vsel %vm118, %v212, %v197
    %v235 = vsel %vm119, %v211, %v198
    %v236 = vsel %vm119, %v212, %v199
    %v237 = vsel %vm120, %v211, %v200
    %v238 = vsel %vm120, %v212, %v201
    %v239 = vsel %vm121, %v211, %v202
    %v240 = vsel %vm121, %v212, %v203
    %v241 = vsel %vm122, %v211, %v204
    %v242 = vsel %vm122, %v212, %v205
    %v243 = vsel %vm123, %v211, %v206
    %v244 = vsel %vm123, %v212, %v207
    %v245 = vsel %vm124, %v211, %v208
    %v246 = vsel %vm124, %v212, %v209
    %v247 = vpack.c.bf16 %v217, %v215
    %v248 = vpack.c.bf16 %v218, %v216
    %v249 = vpack.c.bf16 %v221, %v219
    %v250 = vpack.c.bf16 %v222, %v220
    %v251 = vpack.c.bf16 %v225, %v223
    %v252 = vpack.c.bf16 %v226, %v224
    %v253 = vpack.c.bf16 %v229, %v227
    %v254 = vpack.c.bf16 %v230, %v228
    %v255 = vpack.c.bf16 %v233, %v231
    %v256 = vpack.c.bf16 %v234, %v232
    %v257 = vpack.c.bf16 %v237, %v235
    %v258 = vpack.c.bf16 %v238, %v236
    %v259 = vpack.c.bf16 %v241, %v239
    %v260 = vpack.c.bf16 %v242, %v240
    %v261 = vpack.c.bf16 %v245, %v243
    %v262 = vpack.c.bf16 %v246, %v244
    %v263 = vld [vmem:[%s2] sm:$0xf]
    %v264 = vld [vmem:[%s2 + $0x4] sm:$0xf]
    %v265 = vld [vmem:[%s2 + $0x8] sm:$0xf]
    %v266 = vld [vmem:[%s2 + $0xc] sm:$0xf]
    %v267 = vld [vmem:[%s2 + $0x10] sm:$0xf]
    %v268 = vld [vmem:[%s2 + $0x14] sm:$0xf]
    %v269 = vld [vmem:[%s2 + $0x18] sm:$0xf]
    %v270 = vld [vmem:[%s2 + $0x1c] sm:$0xf]
    %v271 = vld [vmem:[%s2 + $0x20] sm:$0xf]
    %v272 = vld [vmem:[%s2 + $0x24] sm:$0xf]
    %v273 = vld [vmem:[%s2 + $0x28] sm:$0xf]
    %v274 = vld [vmem:[%s2 + $0x2c] sm:$0xf]
    %v275 = vld [vmem:[%s2 + $0x30] sm:$0xf]
    %v276 = vld [vmem:[%s2 + $0x34] sm:$0xf]
    %v277 = vld [vmem:[%s2 + $0x38] sm:$0xf]
    %v278 = vld [vmem:[%s2 + $0x3c] sm:$0xf]
    %v279 = vld [vmem:[%s2 + $0x40] sm:$0xf]
    %v280 = vld [vmem:[%s2 + $0x44] sm:$0xf]
    %v281 = vld [vmem:[%s2 + $0x48] sm:$0xf]
    %v282 = vld [vmem:[%s2 + $0x4c] sm:$0xf]
    %v283 = vld [vmem:[%s2 + $0x50] sm:$0xf]
    %v284 = vld [vmem:[%s2 + $0x54] sm:$0xf]
    %v285 = vld [vmem:[%s2 + $0x58] sm:$0xf]
    %v286 = vld [vmem:[%s2 + $0x5c] sm:$0xf]
    %v287 = vld [vmem:[%s2 + $0x60] sm:$0xf]
    %v288 = vld [vmem:[%s2 + $0x64] sm:$0xf]
    %v289 = vld [vmem:[%s2 + $0x68] sm:$0xf]
    %v290 = vld [vmem:[%s2 + $0x6c] sm:$0xf]
    %v291 = vld [vmem:[%s2 + $0x70] sm:$0xf]
    %v292 = vld [vmem:[%s2 + $0x74] sm:$0xf]
    %v293 = vld [vmem:[%s2 + $0x78] sm:$0xf]
    %v294 = vld [vmem:[%s2 + $0x7c] sm:$0xf]
    %v295 = vld [vmem:[%s2 + $0x80] sm:$0xf]
    %v296 = vld [vmem:[%s2 + $0x84] sm:$0xf]
    %v297 = vld [vmem:[%s2 + $0x88] sm:$0xf]
    %v298 = vld [vmem:[%s2 + $0x8c] sm:$0xf]
    %v299 = vld [vmem:[%s2 + $0x90] sm:$0xf]
    %v300 = vld [vmem:[%s2 + $0x94] sm:$0xf]
    %v301 = vld [vmem:[%s2 + $0x98] sm:$0xf]
    %v302 = vld [vmem:[%s2 + $0x9c] sm:$0xf]
    %v303 = vld [vmem:[%s2 + $0xa0] sm:$0xf]
    %v304 = vld [vmem:[%s2 + $0xa4] sm:$0xf]
    %v305 = vld [vmem:[%s2 + $0xa8] sm:$0xf]
    %v306 = vld [vmem:[%s2 + $0xac] sm:$0xf]
    %v307 = vld [vmem:[%s2 + $0xb0] sm:$0xf]
    %v308 = vld [vmem:[%s2 + $0xb4] sm:$0xf]
    %v309 = vld [vmem:[%s2 + $0xb8] sm:$0xf]
    %v310 = vld [vmem:[%s2 + $0xbc] sm:$0xf]
    %v311 = vld [vmem:[%s2 + $0xc0] sm:$0xf]
    %v312 = vld [vmem:[%s2 + $0xc4] sm:$0xf]
    %v313 = vld [vmem:[%s2 + $0xc8] sm:$0xf]
    %v314 = vld [vmem:[%s2 + $0xcc] sm:$0xf]
    %v315 = vld [vmem:[%s2 + $0xd0] sm:$0xf]
    %v316 = vld [vmem:[%s2 + $0xd4] sm:$0xf]
    %v317 = vld [vmem:[%s2 + $0xd8] sm:$0xf]
    %v318 = vld [vmem:[%s2 + $0xdc] sm:$0xf]
    %v319 = vld [vmem:[%s2 + $0xe0] sm:$0xf]
    %v320 = vld [vmem:[%s2 + $0xe4] sm:$0xf]
    %v321 = vld [vmem:[%s2 + $0xe8] sm:$0xf]
    %v322 = vld [vmem:[%s2 + $0xec] sm:$0xf]
    %v323 = vld [vmem:[%s2 + $0xf0] sm:$0xf]
    %v324 = vld [vmem:[%s2 + $0xf4] sm:$0xf]
    %v325 = vld [vmem:[%s2 + $0xf8] sm:$0xf]
    %v326 = vld [vmem:[%s2 + $0xfc] sm:$0xf]
    %v327 = vld [vmem:[%s2 + $0x100] sm:$0xf]
    %v328 = vld [vmem:[%s2 + $0x104] sm:$0xf]
    %v329 = vld [vmem:[%s2 + $0x108] sm:$0xf]
    %v330 = vld [vmem:[%s2 + $0x10c] sm:$0xf]
    %v331 = vld [vmem:[%s2 + $0x110] sm:$0xf]
    %v332 = vld [vmem:[%s2 + $0x114] sm:$0xf]
    %v333 = vld [vmem:[%s2 + $0x118] sm:$0xf]
    %v334 = vld [vmem:[%s2 + $0x11c] sm:$0xf]
    %v335 = vld [vmem:[%s2 + $0x120] sm:$0xf]
    %v336 = vld [vmem:[%s2 + $0x124] sm:$0xf]
    %v337 = vld [vmem:[%s2 + $0x128] sm:$0xf]
    %v338 = vld [vmem:[%s2 + $0x12c] sm:$0xf]
    %v339 = vld [vmem:[%s2 + $0x130] sm:$0xf]
    %v340 = vld [vmem:[%s2 + $0x134] sm:$0xf]
    %v341 = vld [vmem:[%s2 + $0x138] sm:$0xf]
    %v342 = vld [vmem:[%s2 + $0x13c] sm:$0xf]
    %v343 = vld [vmem:[%s2 + $0x140] sm:$0xf]
    %v344 = vld [vmem:[%s2 + $0x144] sm:$0xf]
    %v345 = vld [vmem:[%s2 + $0x148] sm:$0xf]
    %v346 = vld [vmem:[%s2 + $0x14c] sm:$0xf]
    %v347 = vld [vmem:[%s2 + $0x150] sm:$0xf]
    %v348 = vld [vmem:[%s2 + $0x154] sm:$0xf]
    %v349 = vld [vmem:[%s2 + $0x158] sm:$0xf]
    %v350 = vld [vmem:[%s2 + $0x15c] sm:$0xf]
    %v351 = vld [vmem:[%s2 + $0x160] sm:$0xf]
    %v352 = vld [vmem:[%s2 + $0x164] sm:$0xf]
    %v353 = vld [vmem:[%s2 + $0x168] sm:$0xf]
    %v354 = vld [vmem:[%s2 + $0x16c] sm:$0xf]
    %v355 = vld [vmem:[%s2 + $0x170] sm:$0xf]
    %v356 = vld [vmem:[%s2 + $0x174] sm:$0xf]
    %v357 = vld [vmem:[%s2 + $0x178] sm:$0xf]
    %v358 = vld [vmem:[%s2 + $0x17c] sm:$0xf]
    %v359 = vld [vmem:[%s2 + $0x180] sm:$0xf]
    %v360 = vld [vmem:[%s2 + $0x184] sm:$0xf]
    %v361 = vld [vmem:[%s2 + $0x188] sm:$0xf]
    %v362 = vld [vmem:[%s2 + $0x18c] sm:$0xf]
    %v363 = vld [vmem:[%s2 + $0x190] sm:$0xf]
    %v364 = vld [vmem:[%s2 + $0x194] sm:$0xf]
    %v365 = vld [vmem:[%s2 + $0x198] sm:$0xf]
    %v366 = vld [vmem:[%s2 + $0x19c] sm:$0xf]
    %v367 = vld [vmem:[%s2 + $0x1a0] sm:$0xf]
    %v368 = vld [vmem:[%s2 + $0x1a4] sm:$0xf]
    %v369 = vld [vmem:[%s2 + $0x1a8] sm:$0xf]
    %v370 = vld [vmem:[%s2 + $0x1ac] sm:$0xf]
    %v371 = vld [vmem:[%s2 + $0x1b0] sm:$0xf]
    %v372 = vld [vmem:[%s2 + $0x1b4] sm:$0xf]
    %v373 = vld [vmem:[%s2 + $0x1b8] sm:$0xf]
    %v374 = vld [vmem:[%s2 + $0x1bc] sm:$0xf]
    %v375 = vld [vmem:[%s2 + $0x1c0] sm:$0xf]
    %v376 = vld [vmem:[%s2 + $0x1c4] sm:$0xf]
    %v377 = vld [vmem:[%s2 + $0x1c8] sm:$0xf]
    %v378 = vld [vmem:[%s2 + $0x1cc] sm:$0xf]
    %v379 = vld [vmem:[%s2 + $0x1d0] sm:$0xf]
    %v380 = vld [vmem:[%s2 + $0x1d4] sm:$0xf]
    %v381 = vld [vmem:[%s2 + $0x1d8] sm:$0xf]
    %v382 = vld [vmem:[%s2 + $0x1dc] sm:$0xf]
    %v383 = vld [vmem:[%s2 + $0x1e0] sm:$0xf]
    %v384 = vld [vmem:[%s2 + $0x1e4] sm:$0xf]
    %v385 = vld [vmem:[%s2 + $0x1e8] sm:$0xf]
    %v386 = vld [vmem:[%s2 + $0x1ec] sm:$0xf]
    %v387 = vld [vmem:[%s2 + $0x1f0] sm:$0xf]
    %v388 = vld [vmem:[%s2 + $0x1f4] sm:$0xf]
    %v389 = vld [vmem:[%s2 + $0x1f8] sm:$0xf]
    %v390 = vld [vmem:[%s2 + $0x1fc] sm:$0xf]
    %v391 = vld [vmem:[%s2 + $0x200] sm:$0xf]
    %v521 = vunpack.c.l.b16 %v263
    %v522 = vunpack.c.l.b16 %v264
    %v523 = vunpack.c.l.b16 %v265
    %v524 = vunpack.c.l.b16 %v266
    %v525 = vunpack.c.l.b16 %v267
    %v526 = vunpack.c.l.b16 %v268
    %v527 = vunpack.c.l.b16 %v269
    %v528 = vunpack.c.l.b16 %v270
    %v529 = vunpack.c.l.b16 %v271
    %v530 = vunpack.c.l.b16 %v272
    %v531 = vunpack.c.l.b16 %v273
    %v532 = vunpack.c.l.b16 %v274
    %v533 = vunpack.c.l.b16 %v275
    %v534 = vunpack.c.l.b16 %v276
    %v535 = vunpack.c.l.b16 %v277
    %v536 = vunpack.c.l.b16 %v278
    %v537 = vunpack.c.l.b16 %v279
    %v538 = vunpack.c.l.b16 %v280
    %v539 = vunpack.c.l.b16 %v281
    %v540 = vunpack.c.l.b16 %v282
    %v541 = vunpack.c.l.b16 %v283
    %v542 = vunpack.c.l.b16 %v284
    %v543 = vunpack.c.l.b16 %v285
    %v544 = vunpack.c.l.b16 %v286
    %v545 = vunpack.c.l.b16 %v287
    %v546 = vunpack.c.l.b16 %v288
    %v547 = vunpack.c.l.b16 %v289
    %v548 = vunpack.c.l.b16 %v290
    %v549 = vunpack.c.l.b16 %v291
    %v550 = vunpack.c.l.b16 %v292
    %v551 = vunpack.c.l.b16 %v293
    %v552 = vunpack.c.l.b16 %v294
    %v553 = vunpack.c.l.b16 %v295
    %v554 = vunpack.c.l.b16 %v296
    %v555 = vunpack.c.l.b16 %v297
    %v556 = vunpack.c.l.b16 %v298
    %v557 = vunpack.c.l.b16 %v299
    %v558 = vunpack.c.l.b16 %v300
    %v559 = vunpack.c.l.b16 %v301
    %v560 = vunpack.c.l.b16 %v302
    %v561 = vunpack.c.l.b16 %v303
    %v562 = vunpack.c.l.b16 %v304
    %v563 = vunpack.c.l.b16 %v305
    %v564 = vunpack.c.l.b16 %v306
    %v565 = vunpack.c.l.b16 %v307
    %v566 = vunpack.c.l.b16 %v308
    %v567 = vunpack.c.l.b16 %v309
    %v568 = vunpack.c.l.b16 %v310
    %v569 = vunpack.c.l.b16 %v311
    %v570 = vunpack.c.l.b16 %v312
    %v571 = vunpack.c.l.b16 %v313
    %v572 = vunpack.c.l.b16 %v314
    %v573 = vunpack.c.l.b16 %v315
    %v574 = vunpack.c.l.b16 %v316
    %v575 = vunpack.c.l.b16 %v317
    %v576 = vunpack.c.l.b16 %v318
    %v577 = vunpack.c.l.b16 %v319
    %v578 = vunpack.c.l.b16 %v320
    %v579 = vunpack.c.l.b16 %v321
    %v580 = vunpack.c.l.b16 %v322
    %v581 = vunpack.c.l.b16 %v323
    %v582 = vunpack.c.l.b16 %v324
    %v583 = vunpack.c.l.b16 %v325
    %v584 = vunpack.c.l.b16 %v326
    %v585 = vunpack.c.l.b16 %v327
    %v586 = vunpack.c.l.b16 %v328
    %v587 = vunpack.c.l.b16 %v329
    %v588 = vunpack.c.l.b16 %v330
    %v589 = vunpack.c.l.b16 %v331
    %v590 = vunpack.c.l.b16 %v332
    %v591 = vunpack.c.l.b16 %v333
    %v592 = vunpack.c.l.b16 %v334
    %v593 = vunpack.c.l.b16 %v335
    %v594 = vunpack.c.l.b16 %v336
    %v595 = vunpack.c.l.b16 %v337
    %v596 = vunpack.c.l.b16 %v338
    %v597 = vunpack.c.l.b16 %v339
    %v598 = vunpack.c.l.b16 %v340
    %v599 = vunpack.c.l.b16 %v341
    %v600 = vunpack.c.l.b16 %v342
    %v601 = vunpack.c.l.b16 %v343
    %v602 = vunpack.c.l.b16 %v344
    %v603 = vunpack.c.l.b16 %v345
    %v604 = vunpack.c.l.b16 %v346
    %v605 = vunpack.c.l.b16 %v347
    %v606 = vunpack.c.l.b16 %v348
    %v607 = vunpack.c.l.b16 %v349
    %v608 = vunpack.c.l.b16 %v350
    %v609 = vunpack.c.l.b16 %v351
    %v610 = vunpack.c.l.b16 %v352
    %v611 = vunpack.c.l.b16 %v353
    %v612 = vunpack.c.l.b16 %v354
    %v613 = vunpack.c.l.b16 %v355
    %v614 = vunpack.c.l.b16 %v356
    %v615 = vunpack.c.l.b16 %v357
    %v616 = vunpack.c.l.b16 %v358
    %v617 = vunpack.c.l.b16 %v359
    %v618 = vunpack.c.l.b16 %v360
    %v619 = vunpack.c.l.b16 %v361
    %v620 = vunpack.c.l.b16 %v362
    %v621 = vunpack.c.l.b16 %v363
    %v622 = vunpack.c.l.b16 %v364
    %v623 = vunpack.c.l.b16 %v365
    %v624 = vunpack.c.l.b16 %v366
    %v625 = vunpack.c.l.b16 %v367
    %v626 = vunpack.c.l.b16 %v368
    %v627 = vunpack.c.l.b16 %v369
    %v628 = vunpack.c.l.b16 %v370
    %v629 = vunpack.c.l.b16 %v371
    %v630 = vunpack.c.l.b16 %v372
    %v631 = vunpack.c.l.b16 %v373
    %v632 = vunpack.c.l.b16 %v374
    %v633 = vunpack.c.l.b16 %v375
    %v634 = vunpack.c.l.b16 %v376
    %v635 = vunpack.c.l.b16 %v377
    %v636 = vunpack.c.l.b16 %v378
    %v637 = vunpack.c.l.b16 %v379
    %v638 = vunpack.c.l.b16 %v380
    %v639 = vunpack.c.l.b16 %v381
    %v640 = vunpack.c.l.b16 %v382
    %v641 = vunpack.c.l.b16 %v383
    %v642 = vunpack.c.l.b16 %v384
    %v643 = vunpack.c.l.b16 %v385
    %v644 = vunpack.c.l.b16 %v386
    %v645 = vunpack.c.l.b16 %v387
    %v646 = vunpack.c.l.b16 %v388
    %v647 = vunpack.c.l.b16 %v389
    %v648 = vunpack.c.l.b16 %v390
    %v649 = vunpack.c.l.b16 %v391
    %v650 = vpack.c.b16 %v522, %v521
    %v651 = vpack.c.b16 %v524, %v523
    %v652 = vpack.c.b16 %v526, %v525
    %v653 = vpack.c.b16 %v528, %v527
    %v654 = vpack.c.b16 %v530, %v529
    %v655 = vpack.c.b16 %v532, %v531
    %v656 = vpack.c.b16 %v534, %v533
    %v657 = vpack.c.b16 %v536, %v535
    %v658 = vpack.c.b16 %v538, %v537
    %v659 = vpack.c.b16 %v540, %v539
    %v660 = vpack.c.b16 %v542, %v541
    %v661 = vpack.c.b16 %v544, %v543
    %v662 = vpack.c.b16 %v546, %v545
    %v663 = vpack.c.b16 %v548, %v547
    %v664 = vpack.c.b16 %v550, %v549
    %v665 = vpack.c.b16 %v552, %v551
    %v666 = vpack.c.b16 %v554, %v553
    %v667 = vpack.c.b16 %v556, %v555
    %v668 = vpack.c.b16 %v558, %v557
    %v669 = vpack.c.b16 %v560, %v559
    %v670 = vpack.c.b16 %v562, %v561
    %v671 = vpack.c.b16 %v564, %v563
    %v672 = vpack.c.b16 %v566, %v565
    %v673 = vpack.c.b16 %v568, %v567
    %v674 = vpack.c.b16 %v570, %v569
    %v675 = vpack.c.b16 %v572, %v571
    %v676 = vpack.c.b16 %v574, %v573
    %v677 = vpack.c.b16 %v576, %v575
    %v678 = vpack.c.b16 %v578, %v577
    %v679 = vpack.c.b16 %v580, %v579
    %v680 = vpack.c.b16 %v582, %v581
    %v681 = vpack.c.b16 %v584, %v583
    %v682 = vpack.c.b16 %v586, %v585
    %v683 = vpack.c.b16 %v588, %v587
    %v684 = vpack.c.b16 %v590, %v589
    %v685 = vpack.c.b16 %v592, %v591
    %v686 = vpack.c.b16 %v594, %v593
    %v687 = vpack.c.b16 %v596, %v595
    %v688 = vpack.c.b16 %v598, %v597
    %v689 = vpack.c.b16 %v600, %v599
    %v690 = vpack.c.b16 %v602, %v601
    %v691 = vpack.c.b16 %v604, %v603
    %v692 = vpack.c.b16 %v606, %v605
    %v693 = vpack.c.b16 %v608, %v607
    %v694 = vpack.c.b16 %v610, %v609
    %v695 = vpack.c.b16 %v612, %v611
    %v696 = vpack.c.b16 %v614, %v613
    %v697 = vpack.c.b16 %v616, %v615
    %v698 = vpack.c.b16 %v618, %v617
    %v699 = vpack.c.b16 %v620, %v619
    %v700 = vpack.c.b16 %v622, %v621
    %v701 = vpack.c.b16 %v624, %v623
    %v702 = vpack.c.b16 %v626, %v625
    %v703 = vpack.c.b16 %v628, %v627
    %v704 = vpack.c.b16 %v630, %v629
    %v705 = vpack.c.b16 %v632, %v631
    %v706 = vpack.c.b16 %v634, %v633
    %v707 = vpack.c.b16 %v636, %v635
    %v708 = vpack.c.b16 %v638, %v637
    %v709 = vpack.c.b16 %v640, %v639
    %v710 = vpack.c.b16 %v642, %v641
    %v711 = vpack.c.b16 %v644, %v643
    %v712 = vpack.c.b16 %v646, %v645
    %v713 = vpack.c.b16 %v648, %v647
    %v714 = vpack.c.b16 %v649, %v649
    %780 = vmatpush.bf16.msra.mxu0 %v261
    %781 = vmatpush.bf16.msra.mxu0 %v259
    %782 = vmatpush.bf16.msra.mxu0 %v257
    %783 = vmatpush.bf16.msra.mxu0 %v255
    %784 = vmatpush.bf16.msra.mxu0 %v253
    %785 = vmatpush.bf16.msra.mxu0 %v251
    %786 = vmatpush.bf16.msra.mxu0 %v249
    %787 = vmatpush.bf16.msra.mxu0 %v247
    %788 = vmatmul.bf16.gmra.mxu0 %v650
    %v789 = vpop.f32.mrf.mxu0
    %v790 = vadd.f32 0.0, %v789
    %v791 = vpop.f32.mrf.mxu0
    %v792 = vadd.f32 0.0, %v791
    %793 = vmatmul.bf16.gmra.mxu0 %v651
    %v794 = vpop.f32.mrf.mxu0
    %v795 = vadd.f32 0.0, %v794
    %v796 = vpop.f32.mrf.mxu0
    %v797 = vadd.f32 0.0, %v796
    %798 = vmatmul.bf16.gmra.mxu0 %v652
    %v799 = vpop.f32.mrf.mxu0
    %v800 = vadd.f32 0.0, %v799
    %v801 = vpop.f32.mrf.mxu0
    %v802 = vadd.f32 0.0, %v801
    %803 = vmatmul.bf16.gmra.mxu0 %v653
    %v804 = vpop.f32.mrf.mxu0
    %v805 = vadd.f32 0.0, %v804
    %v806 = vpop.f32.mrf.mxu0
    %v807 = vadd.f32 0.0, %v806
    %808 = vmatmul.bf16.gmra.mxu0 %v654
    %v809 = vpop.f32.mrf.mxu0
    %v810 = vadd.f32 0.0, %v809
    %v811 = vpop.f32.mrf.mxu0
    %v812 = vadd.f32 0.0, %v811
    %813 = vmatmul.bf16.gmra.mxu0 %v655
    %v814 = vpop.f32.mrf.mxu0
    %v815 = vadd.f32 0.0, %v814
    %v816 = vpop.f32.mrf.mxu0
    %v817 = vadd.f32 0.0, %v816
    %818 = vmatmul.bf16.gmra.mxu0 %v656
    %v819 = vpop.f32.mrf.mxu0
    %v820 = vadd.f32 0.0, %v819
    %v821 = vpop.f32.mrf.mxu0
    %v822 = vadd.f32 0.0, %v821
    %823 = vmatmul.bf16.gmra.mxu0 %v657
    %v824 = vpop.f32.mrf.mxu0
    %v825 = vadd.f32 0.0, %v824
    %v826 = vpop.f32.mrf.mxu0
    %v827 = vadd.f32 0.0, %v826
    %828 = vmatmul.bf16.gmra.mxu0 %v658
    %v829 = vpop.f32.mrf.mxu0
    %v830 = vadd.f32 0.0, %v829
    %v831 = vpop.f32.mrf.mxu0
    %v832 = vadd.f32 0.0, %v831
    %833 = vmatmul.bf16.gmra.mxu0 %v659
    %v834 = vpop.f32.mrf.mxu0
    %v835 = vadd.f32 0.0, %v834
    %v836 = vpop.f32.mrf.mxu0
    %v837 = vadd.f32 0.0, %v836
    %838 = vmatmul.bf16.gmra.mxu0 %v660
    %v839 = vpop.f32.mrf.mxu0
    %v840 = vadd.f32 0.0, %v839
    %v841 = vpop.f32.mrf.mxu0
    %v842 = vadd.f32 0.0, %v841
    %843 = vmatmul.bf16.gmra.mxu0 %v661
    %v844 = vpop.f32.mrf.mxu0
    %v845 = vadd.f32 0.0, %v844
    %v846 = vpop.f32.mrf.mxu0
    %v847 = vadd.f32 0.0, %v846
    %848 = vmatmul.bf16.gmra.mxu0 %v662
    %v849 = vpop.f32.mrf.mxu0
    %v850 = vadd.f32 0.0, %v849
    %v851 = vpop.f32.mrf.mxu0
    %v852 = vadd.f32 0.0, %v851
    %853 = vmatmul.bf16.gmra.mxu0 %v663
    %v854 = vpop.f32.mrf.mxu0
    %v855 = vadd.f32 0.0, %v854
    %v856 = vpop.f32.mrf.mxu0
    %v857 = vadd.f32 0.0, %v856
    %858 = vmatmul.bf16.gmra.mxu0 %v664
    %v859 = vpop.f32.mrf.mxu0
    %v860 = vadd.f32 0.0, %v859
    %v861 = vpop.f32.mrf.mxu0
    %v862 = vadd.f32 0.0, %v861
    %863 = vmatmul.bf16.gmra.mxu0 %v665
    %v864 = vpop.f32.mrf.mxu0
    %v865 = vadd.f32 0.0, %v864
    %v866 = vpop.f32.mrf.mxu0
    %v867 = vadd.f32 0.0, %v866
    %868 = vmatmul.bf16.gmra.mxu0 %v666
    %v869 = vpop.f32.mrf.mxu0
    %v870 = vadd.f32 0.0, %v869
    %v871 = vpop.f32.mrf.mxu0
    %v872 = vadd.f32 0.0, %v871
    %873 = vmatmul.bf16.gmra.mxu0 %v667
    %v874 = vpop.f32.mrf.mxu0
    %v875 = vadd.f32 0.0, %v874
    %v876 = vpop.f32.mrf.mxu0
    %v877 = vadd.f32 0.0, %v876
    %878 = vmatmul.bf16.gmra.mxu0 %v668
    %v879 = vpop.f32.mrf.mxu0
    %v880 = vadd.f32 0.0, %v879
    %v881 = vpop.f32.mrf.mxu0
    %v882 = vadd.f32 0.0, %v881
    %883 = vmatmul.bf16.gmra.mxu0 %v669
    %v884 = vpop.f32.mrf.mxu0
    %v885 = vadd.f32 0.0, %v884
    %v886 = vpop.f32.mrf.mxu0
    %v887 = vadd.f32 0.0, %v886
    %888 = vmatmul.bf16.gmra.mxu0 %v670
    %v889 = vpop.f32.mrf.mxu0
    %v890 = vadd.f32 0.0, %v889
    %v891 = vpop.f32.mrf.mxu0
    %v892 = vadd.f32 0.0, %v891
    %893 = vmatmul.bf16.gmra.mxu0 %v671
    %v894 = vpop.f32.mrf.mxu0
    %v895 = vadd.f32 0.0, %v894
    %v896 = vpop.f32.mrf.mxu0
    %v897 = vadd.f32 0.0, %v896
    %898 = vmatmul.bf16.gmra.mxu0 %v672
    %v899 = vpop.f32.mrf.mxu0
    %v900 = vadd.f32 0.0, %v899
    %v901 = vpop.f32.mrf.mxu0
    %v902 = vadd.f32 0.0, %v901
    %903 = vmatmul.bf16.gmra.mxu0 %v673
    %v904 = vpop.f32.mrf.mxu0
    %v905 = vadd.f32 0.0, %v904
    %v906 = vpop.f32.mrf.mxu0
    %v907 = vadd.f32 0.0, %v906
    %908 = vmatmul.bf16.gmra.mxu0 %v674
    %v909 = vpop.f32.mrf.mxu0
    %v910 = vadd.f32 0.0, %v909
    %v911 = vpop.f32.mrf.mxu0
    %v912 = vadd.f32 0.0, %v911
    %913 = vmatmul.bf16.gmra.mxu0 %v675
    %v914 = vpop.f32.mrf.mxu0
    %v915 = vadd.f32 0.0, %v914
    %v916 = vpop.f32.mrf.mxu0
    %v917 = vadd.f32 0.0, %v916
    %918 = vmatmul.bf16.gmra.mxu0 %v676
    %v919 = vpop.f32.mrf.mxu0
    %v920 = vadd.f32 0.0, %v919
    %v921 = vpop.f32.mrf.mxu0
    %v922 = vadd.f32 0.0, %v921
    %923 = vmatmul.bf16.gmra.mxu0 %v677
    %v924 = vpop.f32.mrf.mxu0
    %v925 = vadd.f32 0.0, %v924
    %v926 = vpop.f32.mrf.mxu0
    %v927 = vadd.f32 0.0, %v926
    %928 = vmatmul.bf16.gmra.mxu0 %v678
    %v929 = vpop.f32.mrf.mxu0
    %v930 = vadd.f32 0.0, %v929
    %v931 = vpop.f32.mrf.mxu0
    %v932 = vadd.f32 0.0, %v931
    %933 = vmatmul.bf16.gmra.mxu0 %v679
    %v934 = vpop.f32.mrf.mxu0
    %v935 = vadd.f32 0.0, %v934
    %v936 = vpop.f32.mrf.mxu0
    %v937 = vadd.f32 0.0, %v936
    %938 = vmatmul.bf16.gmra.mxu0 %v680
    %v939 = vpop.f32.mrf.mxu0
    %v940 = vadd.f32 0.0, %v939
    %v941 = vpop.f32.mrf.mxu0
    %v942 = vadd.f32 0.0, %v941
    %943 = vmatmul.bf16.gmra.mxu0 %v681
    %v944 = vpop.f32.mrf.mxu0
    %v945 = vadd.f32 0.0, %v944
    %v946 = vpop.f32.mrf.mxu0
    %v947 = vadd.f32 0.0, %v946
    %948 = vmatmul.bf16.gmra.mxu0 %v682
    %v949 = vpop.f32.mrf.mxu0
    %v950 = vadd.f32 0.0, %v949
    %v951 = vpop.f32.mrf.mxu0
    %v952 = vadd.f32 0.0, %v951
    %953 = vmatmul.bf16.gmra.mxu0 %v683
    %v954 = vpop.f32.mrf.mxu0
    %v955 = vadd.f32 0.0, %v954
    %v956 = vpop.f32.mrf.mxu0
    %v957 = vadd.f32 0.0, %v956
    %958 = vmatmul.bf16.gmra.mxu0 %v684
    %v959 = vpop.f32.mrf.mxu0
    %v960 = vadd.f32 0.0, %v959
    %v961 = vpop.f32.mrf.mxu0
    %v962 = vadd.f32 0.0, %v961
    %963 = vmatmul.bf16.gmra.mxu0 %v685
    %v964 = vpop.f32.mrf.mxu0
    %v965 = vadd.f32 0.0, %v964
    %v966 = vpop.f32.mrf.mxu0
    %v967 = vadd.f32 0.0, %v966
    %968 = vmatmul.bf16.gmra.mxu0 %v686
    %v969 = vpop.f32.mrf.mxu0
    %v970 = vadd.f32 0.0, %v969
    %v971 = vpop.f32.mrf.mxu0
    %v972 = vadd.f32 0.0, %v971
    %973 = vmatmul.bf16.gmra.mxu0 %v687
    %v974 = vpop.f32.mrf.mxu0
    %v975 = vadd.f32 0.0, %v974
    %v976 = vpop.f32.mrf.mxu0
    %v977 = vadd.f32 0.0, %v976
    %978 = vmatmul.bf16.gmra.mxu0 %v688
    %v979 = vpop.f32.mrf.mxu0
    %v980 = vadd.f32 0.0, %v979
    %v981 = vpop.f32.mrf.mxu0
    %v982 = vadd.f32 0.0, %v981
    %983 = vmatmul.bf16.gmra.mxu0 %v689
    %v984 = vpop.f32.mrf.mxu0
    %v985 = vadd.f32 0.0, %v984
    %v986 = vpop.f32.mrf.mxu0
    %v987 = vadd.f32 0.0, %v986
    %988 = vmatmul.bf16.gmra.mxu0 %v690
    %v989 = vpop.f32.mrf.mxu0
    %v990 = vadd.f32 0.0, %v989
    %v991 = vpop.f32.mrf.mxu0
    %v992 = vadd.f32 0.0, %v991
    %993 = vmatmul.bf16.gmra.mxu0 %v691
    %v994 = vpop.f32.mrf.mxu0
    %v995 = vadd.f32 0.0, %v994
    %v996 = vpop.f32.mrf.mxu0
    %v997 = vadd.f32 0.0, %v996
    %998 = vmatmul.bf16.gmra.mxu0 %v692
    %v999 = vpop.f32.mrf.mxu0
    %v1000 = vadd.f32 0.0, %v999
    %v1001 = vpop.f32.mrf.mxu0
    %v1002 = vadd.f32 0.0, %v1001
    %1003 = vmatmul.bf16.gmra.mxu0 %v693
    %v1004 = vpop.f32.mrf.mxu0
    %v1005 = vadd.f32 0.0, %v1004
    %v1006 = vpop.f32.mrf.mxu0
    %v1007 = vadd.f32 0.0, %v1006
    %1008 = vmatmul.bf16.gmra.mxu0 %v694
    %v1009 = vpop.f32.mrf.mxu0
    %v1010 = vadd.f32 0.0, %v1009
    %v1011 = vpop.f32.mrf.mxu0
    %v1012 = vadd.f32 0.0, %v1011
    %1013 = vmatmul.bf16.gmra.mxu0 %v695
    %v1014 = vpop.f32.mrf.mxu0
    %v1015 = vadd.f32 0.0, %v1014
    %v1016 = vpop.f32.mrf.mxu0
    %v1017 = vadd.f32 0.0, %v1016
    %1018 = vmatmul.bf16.gmra.mxu0 %v696
    %v1019 = vpop.f32.mrf.mxu0
    %v1020 = vadd.f32 0.0, %v1019
    %v1021 = vpop.f32.mrf.mxu0
    %v1022 = vadd.f32 0.0, %v1021
    %1023 = vmatmul.bf16.gmra.mxu0 %v697
    %v1024 = vpop.f32.mrf.mxu0
    %v1025 = vadd.f32 0.0, %v1024
    %v1026 = vpop.f32.mrf.mxu0
    %v1027 = vadd.f32 0.0, %v1026
    %1028 = vmatmul.bf16.gmra.mxu0 %v698
    %v1029 = vpop.f32.mrf.mxu0
    %v1030 = vadd.f32 0.0, %v1029
    %v1031 = vpop.f32.mrf.mxu0
    %v1032 = vadd.f32 0.0, %v1031
    %1033 = vmatmul.bf16.gmra.mxu0 %v699
    %v1034 = vpop.f32.mrf.mxu0
    %v1035 = vadd.f32 0.0, %v1034
    %v1036 = vpop.f32.mrf.mxu0
    %v1037 = vadd.f32 0.0, %v1036
    %1038 = vmatmul.bf16.gmra.mxu0 %v700
    %v1039 = vpop.f32.mrf.mxu0
    %v1040 = vadd.f32 0.0, %v1039
    %v1041 = vpop.f32.mrf.mxu0
    %v1042 = vadd.f32 0.0, %v1041
    %1043 = vmatmul.bf16.gmra.mxu0 %v701
    %v1044 = vpop.f32.mrf.mxu0
    %v1045 = vadd.f32 0.0, %v1044
    %v1046 = vpop.f32.mrf.mxu0
    %v1047 = vadd.f32 0.0, %v1046
    %1048 = vmatmul.bf16.gmra.mxu0 %v702
    %v1049 = vpop.f32.mrf.mxu0
    %v1050 = vadd.f32 0.0, %v1049
    %v1051 = vpop.f32.mrf.mxu0
    %v1052 = vadd.f32 0.0, %v1051
    %1053 = vmatmul.bf16.gmra.mxu0 %v703
    %v1054 = vpop.f32.mrf.mxu0
    %v1055 = vadd.f32 0.0, %v1054
    %v1056 = vpop.f32.mrf.mxu0
    %v1057 = vadd.f32 0.0, %v1056
    %1058 = vmatmul.bf16.gmra.mxu0 %v704
    %v1059 = vpop.f32.mrf.mxu0
    %v1060 = vadd.f32 0.0, %v1059
    %v1061 = vpop.f32.mrf.mxu0
    %v1062 = vadd.f32 0.0, %v1061
    %1063 = vmatmul.bf16.gmra.mxu0 %v705
    %v1064 = vpop.f32.mrf.mxu0
    %v1065 = vadd.f32 0.0, %v1064
    %v1066 = vpop.f32.mrf.mxu0
    %v1067 = vadd.f32 0.0, %v1066
    %1068 = vmatmul.bf16.gmra.mxu0 %v706
    %v1069 = vpop.f32.mrf.mxu0
    %v1070 = vadd.f32 0.0, %v1069
    %v1071 = vpop.f32.mrf.mxu0
    %v1072 = vadd.f32 0.0, %v1071
    %1073 = vmatmul.bf16.gmra.mxu0 %v707
    %v1074 = vpop.f32.mrf.mxu0
    %v1075 = vadd.f32 0.0, %v1074
    %v1076 = vpop.f32.mrf.mxu0
    %v1077 = vadd.f32 0.0, %v1076
    %1078 = vmatmul.bf16.gmra.mxu0 %v708
    %v1079 = vpop.f32.mrf.mxu0
    %v1080 = vadd.f32 0.0, %v1079
    %v1081 = vpop.f32.mrf.mxu0
    %v1082 = vadd.f32 0.0, %v1081
    %1083 = vmatmul.bf16.gmra.mxu0 %v709
    %v1084 = vpop.f32.mrf.mxu0
    %v1085 = vadd.f32 0.0, %v1084
    %v1086 = vpop.f32.mrf.mxu0
    %v1087 = vadd.f32 0.0, %v1086
    %1088 = vmatmul.bf16.gmra.mxu0 %v710
    %v1089 = vpop.f32.mrf.mxu0
    %v1090 = vadd.f32 0.0, %v1089
    %v1091 = vpop.f32.mrf.mxu0
    %v1092 = vadd.f32 0.0, %v1091
    %1093 = vmatmul.bf16.gmra.mxu0 %v711
    %v1094 = vpop.f32.mrf.mxu0
    %v1095 = vadd.f32 0.0, %v1094
    %v1096 = vpop.f32.mrf.mxu0
    %v1097 = vadd.f32 0.0, %v1096
    %1098 = vmatmul.bf16.gmra.mxu0 %v712
    %v1099 = vpop.f32.mrf.mxu0
    %v1100 = vadd.f32 0.0, %v1099
    %v1101 = vpop.f32.mrf.mxu0
    %v1102 = vadd.f32 0.0, %v1101
    %1103 = vmatmul.bf16.gmra.mxu0 %v713
    %v1104 = vpop.f32.mrf.mxu0
    %v1105 = vadd.f32 0.0, %v1104
    %v1106 = vpop.f32.mrf.mxu0
    %v1107 = vadd.f32 0.0, %v1106
    %1108 = vmatmul.bf16.gmra.mxu0 %v714
    %v1109 = vpop.f32.mrf.mxu0
    %v1110 = vadd.f32 0.0, %v1109
    %v1111 = vpop.f32.mrf.mxu0
    %1112 = vdwg.mxu0
    %1113 = vmatpush.bf16.msra.mxu0 %v262
    %1114 = vmatpush.bf16.msra.mxu0 %v260
    %1115 = vmatpush.bf16.msra.mxu0 %v258
    %1116 = vmatpush.bf16.msra.mxu0 %v256
    %1117 = vmatpush.bf16.msra.mxu0 %v254
    %1118 = vmatpush.bf16.msra.mxu0 %v252
    %1119 = vmatpush.bf16.msra.mxu0 %v250
    %1120 = vmatpush.bf16.msra.mxu0 %v248
    %1121 = vmatmul.bf16.gmra.mxu0 %v650
    %v1122 = vpop.f32.mrf.mxu0
    %v1123 = vadd.f32 0.0, %v1122
    %v1124 = vpop.f32.mrf.mxu0
    %v1125 = vadd.f32 0.0, %v1124
    %1126 = vmatmul.bf16.gmra.mxu0 %v651
    %v1127 = vpop.f32.mrf.mxu0
    %v1128 = vadd.f32 0.0, %v1127
    %v1129 = vpop.f32.mrf.mxu0
    %v1130 = vadd.f32 0.0, %v1129
    %1131 = vmatmul.bf16.gmra.mxu0 %v652
    %v1132 = vpop.f32.mrf.mxu0
    %v1133 = vadd.f32 0.0, %v1132
    %v1134 = vpop.f32.mrf.mxu0
    %v1135 = vadd.f32 0.0, %v1134
    %1136 = vmatmul.bf16.gmra.mxu0 %v653
    %v1137 = vpop.f32.mrf.mxu0
    %v1138 = vadd.f32 0.0, %v1137
    %v1139 = vpop.f32.mrf.mxu0
    %v1140 = vadd.f32 0.0, %v1139
    %1141 = vmatmul.bf16.gmra.mxu0 %v654
    %v1142 = vpop.f32.mrf.mxu0
    %v1143 = vadd.f32 0.0, %v1142
    %v1144 = vpop.f32.mrf.mxu0
    %v1145 = vadd.f32 0.0, %v1144
    %1146 = vmatmul.bf16.gmra.mxu0 %v655
    %v1147 = vpop.f32.mrf.mxu0
    %v1148 = vadd.f32 0.0, %v1147
    %v1149 = vpop.f32.mrf.mxu0
    %v1150 = vadd.f32 0.0, %v1149
    %1151 = vmatmul.bf16.gmra.mxu0 %v656
    %v1152 = vpop.f32.mrf.mxu0
    %v1153 = vadd.f32 0.0, %v1152
    %v1154 = vpop.f32.mrf.mxu0
    %v1155 = vadd.f32 0.0, %v1154
    %1156 = vmatmul.bf16.gmra.mxu0 %v657
    %v1157 = vpop.f32.mrf.mxu0
    %v1158 = vadd.f32 0.0, %v1157
    %v1159 = vpop.f32.mrf.mxu0
    %v1160 = vadd.f32 0.0, %v1159
    %1161 = vmatmul.bf16.gmra.mxu0 %v658
    %v1162 = vpop.f32.mrf.mxu0
    %v1163 = vadd.f32 0.0, %v1162
    %v1164 = vpop.f32.mrf.mxu0
    %v1165 = vadd.f32 0.0, %v1164
    %1166 = vmatmul.bf16.gmra.mxu0 %v659
    %v1167 = vpop.f32.mrf.mxu0
    %v1168 = vadd.f32 0.0, %v1167
    %v1169 = vpop.f32.mrf.mxu0
    %v1170 = vadd.f32 0.0, %v1169
    %1171 = vmatmul.bf16.gmra.mxu0 %v660
    %v1172 = vpop.f32.mrf.mxu0
    %v1173 = vadd.f32 0.0, %v1172
    %v1174 = vpop.f32.mrf.mxu0
    %v1175 = vadd.f32 0.0, %v1174
    %1176 = vmatmul.bf16.gmra.mxu0 %v661
    %v1177 = vpop.f32.mrf.mxu0
    %v1178 = vadd.f32 0.0, %v1177
    %v1179 = vpop.f32.mrf.mxu0
    %v1180 = vadd.f32 0.0, %v1179
    %1181 = vmatmul.bf16.gmra.mxu0 %v662
    %v1182 = vpop.f32.mrf.mxu0
    %v1183 = vadd.f32 0.0, %v1182
    %v1184 = vpop.f32.mrf.mxu0
    %v1185 = vadd.f32 0.0, %v1184
    %1186 = vmatmul.bf16.gmra.mxu0 %v663
    %v1187 = vpop.f32.mrf.mxu0
    %v1188 = vadd.f32 0.0, %v1187
    %v1189 = vpop.f32.mrf.mxu0
    %v1190 = vadd.f32 0.0, %v1189
    %1191 = vmatmul.bf16.gmra.mxu0 %v664
    %v1192 = vpop.f32.mrf.mxu0
    %v1193 = vadd.f32 0.0, %v1192
    %v1194 = vpop.f32.mrf.mxu0
    %v1195 = vadd.f32 0.0, %v1194
    %1196 = vmatmul.bf16.gmra.mxu0 %v665
    %v1197 = vpop.f32.mrf.mxu0
    %v1198 = vadd.f32 0.0, %v1197
    %v1199 = vpop.f32.mrf.mxu0
    %v1200 = vadd.f32 0.0, %v1199
    %1201 = vmatmul.bf16.gmra.mxu0 %v666
    %v1202 = vpop.f32.mrf.mxu0
    %v1203 = vadd.f32 0.0, %v1202
    %v1204 = vpop.f32.mrf.mxu0
    %v1205 = vadd.f32 0.0, %v1204
    %1206 = vmatmul.bf16.gmra.mxu0 %v667
    %v1207 = vpop.f32.mrf.mxu0
    %v1208 = vadd.f32 0.0, %v1207
    %v1209 = vpop.f32.mrf.mxu0
    %v1210 = vadd.f32 0.0, %v1209
    %1211 = vmatmul.bf16.gmra.mxu0 %v668
    %v1212 = vpop.f32.mrf.mxu0
    %v1213 = vadd.f32 0.0, %v1212
    %v1214 = vpop.f32.mrf.mxu0
    %v1215 = vadd.f32 0.0, %v1214
    %1216 = vmatmul.bf16.gmra.mxu0 %v669
    %v1217 = vpop.f32.mrf.mxu0
    %v1218 = vadd.f32 0.0, %v1217
    %v1219 = vpop.f32.mrf.mxu0
    %v1220 = vadd.f32 0.0, %v1219
    %1221 = vmatmul.bf16.gmra.mxu0 %v670
    %v1222 = vpop.f32.mrf.mxu0
    %v1223 = vadd.f32 0.0, %v1222
    %v1224 = vpop.f32.mrf.mxu0
    %v1225 = vadd.f32 0.0, %v1224
    %1226 = vmatmul.bf16.gmra.mxu0 %v671
    %v1227 = vpop.f32.mrf.mxu0
    %v1228 = vadd.f32 0.0, %v1227
    %v1229 = vpop.f32.mrf.mxu0
    %v1230 = vadd.f32 0.0, %v1229
    %1231 = vmatmul.bf16.gmra.mxu0 %v672
    %v1232 = vpop.f32.mrf.mxu0
    %v1233 = vadd.f32 0.0, %v1232
    %v1234 = vpop.f32.mrf.mxu0
    %v1235 = vadd.f32 0.0, %v1234
    %1236 = vmatmul.bf16.gmra.mxu0 %v673
    %v1237 = vpop.f32.mrf.mxu0
    %v1238 = vadd.f32 0.0, %v1237
    %v1239 = vpop.f32.mrf.mxu0
    %v1240 = vadd.f32 0.0, %v1239
    %1241 = vmatmul.bf16.gmra.mxu0 %v674
    %v1242 = vpop.f32.mrf.mxu0
    %v1243 = vadd.f32 0.0, %v1242
    %v1244 = vpop.f32.mrf.mxu0
    %v1245 = vadd.f32 0.0, %v1244
    %1246 = vmatmul.bf16.gmra.mxu0 %v675
    %v1247 = vpop.f32.mrf.mxu0
    %v1248 = vadd.f32 0.0, %v1247
    %v1249 = vpop.f32.mrf.mxu0
    %v1250 = vadd.f32 0.0, %v1249
    %1251 = vmatmul.bf16.gmra.mxu0 %v676
    %v1252 = vpop.f32.mrf.mxu0
    %v1253 = vadd.f32 0.0, %v1252
    %v1254 = vpop.f32.mrf.mxu0
    %v1255 = vadd.f32 0.0, %v1254
    %1256 = vmatmul.bf16.gmra.mxu0 %v677
    %v1257 = vpop.f32.mrf.mxu0
    %v1258 = vadd.f32 0.0, %v1257
    %v1259 = vpop.f32.mrf.mxu0
    %v1260 = vadd.f32 0.0, %v1259
    %1261 = vmatmul.bf16.gmra.mxu0 %v678
    %v1262 = vpop.f32.mrf.mxu0
    %v1263 = vadd.f32 0.0, %v1262
    %v1264 = vpop.f32.mrf.mxu0
    %v1265 = vadd.f32 0.0, %v1264
    %1266 = vmatmul.bf16.gmra.mxu0 %v679
    %v1267 = vpop.f32.mrf.mxu0
    %v1268 = vadd.f32 0.0, %v1267
    %v1269 = vpop.f32.mrf.mxu0
    %v1270 = vadd.f32 0.0, %v1269
    %1271 = vmatmul.bf16.gmra.mxu0 %v680
    %v1272 = vpop.f32.mrf.mxu0
    %v1273 = vadd.f32 0.0, %v1272
    %v1274 = vpop.f32.mrf.mxu0
    %v1275 = vadd.f32 0.0, %v1274
    %1276 = vmatmul.bf16.gmra.mxu0 %v681
    %v1277 = vpop.f32.mrf.mxu0
    %v1278 = vadd.f32 0.0, %v1277
    %v1279 = vpop.f32.mrf.mxu0
    %v1280 = vadd.f32 0.0, %v1279
    %1281 = vmatmul.bf16.gmra.mxu0 %v682
    %v1282 = vpop.f32.mrf.mxu0
    %v1283 = vadd.f32 0.0, %v1282
    %v1284 = vpop.f32.mrf.mxu0
    %v1285 = vadd.f32 0.0, %v1284
    %1286 = vmatmul.bf16.gmra.mxu0 %v683
    %v1287 = vpop.f32.mrf.mxu0
    %v1288 = vadd.f32 0.0, %v1287
    %v1289 = vpop.f32.mrf.mxu0
    %v1290 = vadd.f32 0.0, %v1289
    %1291 = vmatmul.bf16.gmra.mxu0 %v684
    %v1292 = vpop.f32.mrf.mxu0
    %v1293 = vadd.f32 0.0, %v1292
    %v1294 = vpop.f32.mrf.mxu0
    %v1295 = vadd.f32 0.0, %v1294
    %1296 = vmatmul.bf16.gmra.mxu0 %v685
    %v1297 = vpop.f32.mrf.mxu0
    %v1298 = vadd.f32 0.0, %v1297
    %v1299 = vpop.f32.mrf.mxu0
    %v1300 = vadd.f32 0.0, %v1299
    %1301 = vmatmul.bf16.gmra.mxu0 %v686
    %v1302 = vpop.f32.mrf.mxu0
    %v1303 = vadd.f32 0.0, %v1302
    %v1304 = vpop.f32.mrf.mxu0
    %v1305 = vadd.f32 0.0, %v1304
    %1306 = vmatmul.bf16.gmra.mxu0 %v687
    %v1307 = vpop.f32.mrf.mxu0
    %v1308 = vadd.f32 0.0, %v1307
    %v1309 = vpop.f32.mrf.mxu0
    %v1310 = vadd.f32 0.0, %v1309
    %1311 = vmatmul.bf16.gmra.mxu0 %v688
    %v1312 = vpop.f32.mrf.mxu0
    %v1313 = vadd.f32 0.0, %v1312
    %v1314 = vpop.f32.mrf.mxu0
    %v1315 = vadd.f32 0.0, %v1314
    %1316 = vmatmul.bf16.gmra.mxu0 %v689
    %v1317 = vpop.f32.mrf.mxu0
    %v1318 = vadd.f32 0.0, %v1317
    %v1319 = vpop.f32.mrf.mxu0
    %v1320 = vadd.f32 0.0, %v1319
    %1321 = vmatmul.bf16.gmra.mxu0 %v690
    %v1322 = vpop.f32.mrf.mxu0
    %v1323 = vadd.f32 0.0, %v1322
    %v1324 = vpop.f32.mrf.mxu0
    %v1325 = vadd.f32 0.0, %v1324
    %1326 = vmatmul.bf16.gmra.mxu0 %v691
    %v1327 = vpop.f32.mrf.mxu0
    %v1328 = vadd.f32 0.0, %v1327
    %v1329 = vpop.f32.mrf.mxu0
    %v1330 = vadd.f32 0.0, %v1329
    %1331 = vmatmul.bf16.gmra.mxu0 %v692
    %v1332 = vpop.f32.mrf.mxu0
    %v1333 = vadd.f32 0.0, %v1332
    %v1334 = vpop.f32.mrf.mxu0
    %v1335 = vadd.f32 0.0, %v1334
    %1336 = vmatmul.bf16.gmra.mxu0 %v693
    %v1337 = vpop.f32.mrf.mxu0
    %v1338 = vadd.f32 0.0, %v1337
    %v1339 = vpop.f32.mrf.mxu0
    %v1340 = vadd.f32 0.0, %v1339
    %1341 = vmatmul.bf16.gmra.mxu0 %v694
    %v1342 = vpop.f32.mrf.mxu0
    %v1343 = vadd.f32 0.0, %v1342
    %v1344 = vpop.f32.mrf.mxu0
    %v1345 = vadd.f32 0.0, %v1344
    %1346 = vmatmul.bf16.gmra.mxu0 %v695
    %v1347 = vpop.f32.mrf.mxu0
    %v1348 = vadd.f32 0.0, %v1347
    %v1349 = vpop.f32.mrf.mxu0
    %v1350 = vadd.f32 0.0, %v1349
    %1351 = vmatmul.bf16.gmra.mxu0 %v696
    %v1352 = vpop.f32.mrf.mxu0
    %v1353 = vadd.f32 0.0, %v1352
    %v1354 = vpop.f32.mrf.mxu0
    %v1355 = vadd.f32 0.0, %v1354
    %1356 = vmatmul.bf16.gmra.mxu0 %v697
    %v1357 = vpop.f32.mrf.mxu0
    %v1358 = vadd.f32 0.0, %v1357
    %v1359 = vpop.f32.mrf.mxu0
    %v1360 = vadd.f32 0.0, %v1359
    %1361 = vmatmul.bf16.gmra.mxu0 %v698
    %v1362 = vpop.f32.mrf.mxu0
    %v1363 = vadd.f32 0.0, %v1362
    %v1364 = vpop.f32.mrf.mxu0
    %v1365 = vadd.f32 0.0, %v1364
    %1366 = vmatmul.bf16.gmra.mxu0 %v699
    %v1367 = vpop.f32.mrf.mxu0
    %v1368 = vadd.f32 0.0, %v1367
    %v1369 = vpop.f32.mrf.mxu0
    %v1370 = vadd.f32 0.0, %v1369
    %1371 = vmatmul.bf16.gmra.mxu0 %v700
    %v1372 = vpop.f32.mrf.mxu0
    %v1373 = vadd.f32 0.0, %v1372
    %v1374 = vpop.f32.mrf.mxu0
    %v1375 = vadd.f32 0.0, %v1374
    %1376 = vmatmul.bf16.gmra.mxu0 %v701
    %v1377 = vpop.f32.mrf.mxu0
    %v1378 = vadd.f32 0.0, %v1377
    %v1379 = vpop.f32.mrf.mxu0
    %v1380 = vadd.f32 0.0, %v1379
    %1381 = vmatmul.bf16.gmra.mxu0 %v702
    %v1382 = vpop.f32.mrf.mxu0
    %v1383 = vadd.f32 0.0, %v1382
    %v1384 = vpop.f32.mrf.mxu0
    %v1385 = vadd.f32 0.0, %v1384
    %1386 = vmatmul.bf16.gmra.mxu0 %v703
    %v1387 = vpop.f32.mrf.mxu0
    %v1388 = vadd.f32 0.0, %v1387
    %v1389 = vpop.f32.mrf.mxu0
    %v1390 = vadd.f32 0.0, %v1389
    %1391 = vmatmul.bf16.gmra.mxu0 %v704
    %v1392 = vpop.f32.mrf.mxu0
    %v1393 = vadd.f32 0.0, %v1392
    %v1394 = vpop.f32.mrf.mxu0
    %v1395 = vadd.f32 0.0, %v1394
    %1396 = vmatmul.bf16.gmra.mxu0 %v705
    %v1397 = vpop.f32.mrf.mxu0
    %v1398 = vadd.f32 0.0, %v1397
    %v1399 = vpop.f32.mrf.mxu0
    %v1400 = vadd.f32 0.0, %v1399
    %1401 = vmatmul.bf16.gmra.mxu0 %v706
    %v1402 = vpop.f32.mrf.mxu0
    %v1403 = vadd.f32 0.0, %v1402
    %v1404 = vpop.f32.mrf.mxu0
    %v1405 = vadd.f32 0.0, %v1404
    %1406 = vmatmul.bf16.gmra.mxu0 %v707
    %v1407 = vpop.f32.mrf.mxu0
    %v1408 = vadd.f32 0.0, %v1407
    %v1409 = vpop.f32.mrf.mxu0
    %v1410 = vadd.f32 0.0, %v1409
    %1411 = vmatmul.bf16.gmra.mxu0 %v708
    %v1412 = vpop.f32.mrf.mxu0
    %v1413 = vadd.f32 0.0, %v1412
    %v1414 = vpop.f32.mrf.mxu0
    %v1415 = vadd.f32 0.0, %v1414
    %1416 = vmatmul.bf16.gmra.mxu0 %v709
    %v1417 = vpop.f32.mrf.mxu0
    %v1418 = vadd.f32 0.0, %v1417
    %v1419 = vpop.f32.mrf.mxu0
    %v1420 = vadd.f32 0.0, %v1419
    %1421 = vmatmul.bf16.gmra.mxu0 %v710
    %v1422 = vpop.f32.mrf.mxu0
    %v1423 = vadd.f32 0.0, %v1422
    %v1424 = vpop.f32.mrf.mxu0
    %v1425 = vadd.f32 0.0, %v1424
    %1426 = vmatmul.bf16.gmra.mxu0 %v711
    %v1427 = vpop.f32.mrf.mxu0
    %v1428 = vadd.f32 0.0, %v1427
    %v1429 = vpop.f32.mrf.mxu0
    %v1430 = vadd.f32 0.0, %v1429
    %1431 = vmatmul.bf16.gmra.mxu0 %v712
    %v1432 = vpop.f32.mrf.mxu0
    %v1433 = vadd.f32 0.0, %v1432
    %v1434 = vpop.f32.mrf.mxu0
    %v1435 = vadd.f32 0.0, %v1434
    %1436 = vmatmul.bf16.gmra.mxu0 %v713
    %v1437 = vpop.f32.mrf.mxu0
    %v1438 = vadd.f32 0.0, %v1437
    %v1439 = vpop.f32.mrf.mxu0
    %v1440 = vadd.f32 0.0, %v1439
    %1441 = vmatmul.bf16.gmra.mxu0 %v714
    %v1442 = vpop.f32.mrf.mxu0
    %v1443 = vadd.f32 0.0, %v1442
    %v1444 = vpop.f32.mrf.mxu0
    %1445 = vdwg.mxu0
    %v1446 = vmax.f32 %v790, 0.0
    %v1447 = vmax.f32 %v1123, 0.0
    %v1448 = vmax.f32 %v792, 0.0
    %v1449 = vmax.f32 %v1125, 0.0
    %v1450 = vmax.f32 %v795, 0.0
    %v1451 = vmax.f32 %v1128, 0.0
    %v1452 = vmax.f32 %v797, 0.0
    %v1453 = vmax.f32 %v1130, 0.0
    %v1454 = vmax.f32 %v800, 0.0
    %v1455 = vmax.f32 %v1133, 0.0
    %v1456 = vmax.f32 %v802, 0.0
    %v1457 = vmax.f32 %v1135, 0.0
    %v1458 = vmax.f32 %v805, 0.0
    %v1459 = vmax.f32 %v1138, 0.0
    %v1460 = vmax.f32 %v807, 0.0
    %v1461 = vmax.f32 %v1140, 0.0
    %v1462 = vmax.f32 %v810, 0.0
    %v1463 = vmax.f32 %v1143, 0.0
    %v1464 = vmax.f32 %v812, 0.0
    %v1465 = vmax.f32 %v1145, 0.0
    %v1466 = vmax.f32 %v815, 0.0
    %v1467 = vmax.f32 %v1148, 0.0
    %v1468 = vmax.f32 %v817, 0.0
    %v1469 = vmax.f32 %v1150, 0.0
    %v1470 = vmax.f32 %v820, 0.0
    %v1471 = vmax.f32 %v1153, 0.0
    %v1472 = vmax.f32 %v822, 0.0
    %v1473 = vmax.f32 %v1155, 0.0
    %v1474 = vmax.f32 %v825, 0.0
    %v1475 = vmax.f32 %v1158, 0.0
    %v1476 = vmax.f32 %v827, 0.0
    %v1477 = vmax.f32 %v1160, 0.0
    %v1478 = vmax.f32 %v830, 0.0
    %v1479 = vmax.f32 %v1163, 0.0
    %v1480 = vmax.f32 %v832, 0.0
    %v1481 = vmax.f32 %v1165, 0.0
    %v1482 = vmax.f32 %v835, 0.0
    %v1483 = vmax.f32 %v1168, 0.0
    %v1484 = vmax.f32 %v837, 0.0
    %v1485 = vmax.f32 %v1170, 0.0
    %v1486 = vmax.f32 %v840, 0.0
    %v1487 = vmax.f32 %v1173, 0.0
    %v1488 = vmax.f32 %v842, 0.0
    %v1489 = vmax.f32 %v1175, 0.0
    %v1490 = vmax.f32 %v845, 0.0
    %v1491 = vmax.f32 %v1178, 0.0
    %v1492 = vmax.f32 %v847, 0.0
    %v1493 = vmax.f32 %v1180, 0.0
    %v1494 = vmax.f32 %v850, 0.0
    %v1495 = vmax.f32 %v1183, 0.0
    %v1496 = vmax.f32 %v852, 0.0
    %v1497 = vmax.f32 %v1185, 0.0
    %v1498 = vmax.f32 %v855, 0.0
    %v1499 = vmax.f32 %v1188, 0.0
    %v1500 = vmax.f32 %v857, 0.0
    %v1501 = vmax.f32 %v1190, 0.0
    %v1502 = vmax.f32 %v860, 0.0
    %v1503 = vmax.f32 %v1193, 0.0
    %v1504 = vmax.f32 %v862, 0.0
    %v1505 = vmax.f32 %v1195, 0.0
    %v1506 = vmax.f32 %v865, 0.0
    %v1507 = vmax.f32 %v1198, 0.0
    %v1508 = vmax.f32 %v867, 0.0
    %v1509 = vmax.f32 %v1200, 0.0
    %v1510 = vmax.f32 %v870, 0.0
    %v1511 = vmax.f32 %v1203, 0.0
    %v1512 = vmax.f32 %v872, 0.0
    %v1513 = vmax.f32 %v1205, 0.0
    %v1514 = vmax.f32 %v875, 0.0
    %v1515 = vmax.f32 %v1208, 0.0
    %v1516 = vmax.f32 %v877, 0.0
    %v1517 = vmax.f32 %v1210, 0.0
    %v1518 = vmax.f32 %v880, 0.0
    %v1519 = vmax.f32 %v1213, 0.0
    %v1520 = vmax.f32 %v882, 0.0
    %v1521 = vmax.f32 %v1215, 0.0
    %v1522 = vmax.f32 %v885, 0.0
    %v1523 = vmax.f32 %v1218, 0.0
    %v1524 = vmax.f32 %v887, 0.0
    %v1525 = vmax.f32 %v1220, 0.0
    %v1526 = vmax.f32 %v890, 0.0
    %v1527 = vmax.f32 %v1223, 0.0
    %v1528 = vmax.f32 %v892, 0.0
    %v1529 = vmax.f32 %v1225, 0.0
    %v1530 = vmax.f32 %v895, 0.0
    %v1531 = vmax.f32 %v1228, 0.0
    %v1532 = vmax.f32 %v897, 0.0
    %v1533 = vmax.f32 %v1230, 0.0
    %v1534 = vmax.f32 %v900, 0.0
    %v1535 = vmax.f32 %v1233, 0.0
    %v1536 = vmax.f32 %v902, 0.0
    %v1537 = vmax.f32 %v1235, 0.0
    %v1538 = vmax.f32 %v905, 0.0
    %v1539 = vmax.f32 %v1238, 0.0
    %v1540 = vmax.f32 %v907, 0.0
    %v1541 = vmax.f32 %v1240, 0.0
    %v1542 = vmax.f32 %v910, 0.0
    %v1543 = vmax.f32 %v1243, 0.0
    %v1544 = vmax.f32 %v912, 0.0
    %v1545 = vmax.f32 %v1245, 0.0
    %v1546 = vmax.f32 %v915, 0.0
    %v1547 = vmax.f32 %v1248, 0.0
    %v1548 = vmax.f32 %v917, 0.0
    %v1549 = vmax.f32 %v1250, 0.0
    %v1550 = vmax.f32 %v920, 0.0
    %v1551 = vmax.f32 %v1253, 0.0
    %v1552 = vmax.f32 %v922, 0.0
    %v1553 = vmax.f32 %v1255, 0.0
    %v1554 = vmax.f32 %v925, 0.0
    %v1555 = vmax.f32 %v1258, 0.0
    %v1556 = vmax.f32 %v927, 0.0
    %v1557 = vmax.f32 %v1260, 0.0
    %v1558 = vmax.f32 %v930, 0.0
    %v1559 = vmax.f32 %v1263, 0.0
    %v1560 = vmax.f32 %v932, 0.0
    %v1561 = vmax.f32 %v1265, 0.0
    %v1562 = vmax.f32 %v935, 0.0
    %v1563 = vmax.f32 %v1268, 0.0
    %v1564 = vmax.f32 %v937, 0.0
    %v1565 = vmax.f32 %v1270, 0.0
    %v1566 = vmax.f32 %v940, 0.0
    %v1567 = vmax.f32 %v1273, 0.0
    %v1568 = vmax.f32 %v942, 0.0
    %v1569 = vmax.f32 %v1275, 0.0
    %v1570 = vmax.f32 %v945, 0.0
    %v1571 = vmax.f32 %v1278, 0.0
    %v1572 = vmax.f32 %v947, 0.0
    %v1573 = vmax.f32 %v1280, 0.0
    %v1574 = vmax.f32 %v950, 0.0
    %v1575 = vmax.f32 %v1283, 0.0
    %v1576 = vmax.f32 %v952, 0.0
    %v1577 = vmax.f32 %v1285, 0.0
    %v1578 = vmax.f32 %v955, 0.0
    %v1579 = vmax.f32 %v1288, 0.0
    %v1580 = vmax.f32 %v957, 0.0
    %v1581 = vmax.f32 %v1290, 0.0
    %v1582 = vmax.f32 %v960, 0.0
    %v1583 = vmax.f32 %v1293, 0.0
    %v1584 = vmax.f32 %v962, 0.0
    %v1585 = vmax.f32 %v1295, 0.0
    %v1586 = vmax.f32 %v965, 0.0
    %v1587 = vmax.f32 %v1298, 0.0
    %v1588 = vmax.f32 %v967, 0.0
    %v1589 = vmax.f32 %v1300, 0.0
    %v1590 = vmax.f32 %v970, 0.0
    %v1591 = vmax.f32 %v1303, 0.0
    %v1592 = vmax.f32 %v972, 0.0
    %v1593 = vmax.f32 %v1305, 0.0
    %v1594 = vmax.f32 %v975, 0.0
    %v1595 = vmax.f32 %v1308, 0.0
    %v1596 = vmax.f32 %v977, 0.0
    %v1597 = vmax.f32 %v1310, 0.0
    %v1598 = vmax.f32 %v980, 0.0
    %v1599 = vmax.f32 %v1313, 0.0
    %v1600 = vmax.f32 %v982, 0.0
    %v1601 = vmax.f32 %v1315, 0.0
    %v1602 = vmax.f32 %v985, 0.0
    %v1603 = vmax.f32 %v1318, 0.0
    %v1604 = vmax.f32 %v987, 0.0
    %v1605 = vmax.f32 %v1320, 0.0
    %v1606 = vmax.f32 %v990, 0.0
    %v1607 = vmax.f32 %v1323, 0.0
    %v1608 = vmax.f32 %v992, 0.0
    %v1609 = vmax.f32 %v1325, 0.0
    %v1610 = vmax.f32 %v995, 0.0
    %v1611 = vmax.f32 %v1328, 0.0
    %v1612 = vmax.f32 %v997, 0.0
    %v1613 = vmax.f32 %v1330, 0.0
    %v1614 = vmax.f32 %v1000, 0.0
    %v1615 = vmax.f32 %v1333, 0.0
    %v1616 = vmax.f32 %v1002, 0.0
    %v1617 = vmax.f32 %v1335, 0.0
    %v1618 = vmax.f32 %v1005, 0.0
    %v1619 = vmax.f32 %v1338, 0.0
    %v1620 = vmax.f32 %v1007, 0.0
    %v1621 = vmax.f32 %v1340, 0.0
    %v1622 = vmax.f32 %v1010, 0.0
    %v1623 = vmax.f32 %v1343, 0.0
    %v1624 = vmax.f32 %v1012, 0.0
    %v1625 = vmax.f32 %v1345, 0.0
    %v1626 = vmax.f32 %v1015, 0.0
    %v1627 = vmax.f32 %v1348, 0.0
    %v1628 = vmax.f32 %v1017, 0.0
    %v1629 = vmax.f32 %v1350, 0.0
    %v1630 = vmax.f32 %v1020, 0.0
    %v1631 = vmax.f32 %v1353, 0.0
    %v1632 = vmax.f32 %v1022, 0.0
    %v1633 = vmax.f32 %v1355, 0.0
    %v1634 = vmax.f32 %v1025, 0.0
    %v1635 = vmax.f32 %v1358, 0.0
    %v1636 = vmax.f32 %v1027, 0.0
    %v1637 = vmax.f32 %v1360, 0.0
    %v1638 = vmax.f32 %v1030, 0.0
    %v1639 = vmax.f32 %v1363, 0.0
    %v1640 = vmax.f32 %v1032, 0.0
    %v1641 = vmax.f32 %v1365, 0.0
    %v1642 = vmax.f32 %v1035, 0.0
    %v1643 = vmax.f32 %v1368, 0.0
    %v1644 = vmax.f32 %v1037, 0.0
    %v1645 = vmax.f32 %v1370, 0.0
    %v1646 = vmax.f32 %v1040, 0.0
    %v1647 = vmax.f32 %v1373, 0.0
    %v1648 = vmax.f32 %v1042, 0.0
    %v1649 = vmax.f32 %v1375, 0.0
    %v1650 = vmax.f32 %v1045, 0.0
    %v1651 = vmax.f32 %v1378, 0.0
    %v1652 = vmax.f32 %v1047, 0.0
    %v1653 = vmax.f32 %v1380, 0.0
    %v1654 = vmax.f32 %v1050, 0.0
    %v1655 = vmax.f32 %v1383, 0.0
    %v1656 = vmax.f32 %v1052, 0.0
    %v1657 = vmax.f32 %v1385, 0.0
    %v1658 = vmax.f32 %v1055, 0.0
    %v1659 = vmax.f32 %v1388, 0.0
    %v1660 = vmax.f32 %v1057, 0.0
    %v1661 = vmax.f32 %v1390, 0.0
    %v1662 = vmax.f32 %v1060, 0.0
    %v1663 = vmax.f32 %v1393, 0.0
    %v1664 = vmax.f32 %v1062, 0.0
    %v1665 = vmax.f32 %v1395, 0.0
    %v1666 = vmax.f32 %v1065, 0.0
    %v1667 = vmax.f32 %v1398, 0.0
    %v1668 = vmax.f32 %v1067, 0.0
    %v1669 = vmax.f32 %v1400, 0.0
    %v1670 = vmax.f32 %v1070, 0.0
    %v1671 = vmax.f32 %v1403, 0.0
    %v1672 = vmax.f32 %v1072, 0.0
    %v1673 = vmax.f32 %v1405, 0.0
    %v1674 = vmax.f32 %v1075, 0.0
    %v1675 = vmax.f32 %v1408, 0.0
    %v1676 = vmax.f32 %v1077, 0.0
    %v1677 = vmax.f32 %v1410, 0.0
    %v1678 = vmax.f32 %v1080, 0.0
    %v1679 = vmax.f32 %v1413, 0.0
    %v1680 = vmax.f32 %v1082, 0.0
    %v1681 = vmax.f32 %v1415, 0.0
    %v1682 = vmax.f32 %v1085, 0.0
    %v1683 = vmax.f32 %v1418, 0.0
    %v1684 = vmax.f32 %v1087, 0.0
    %v1685 = vmax.f32 %v1420, 0.0
    %v1686 = vmax.f32 %v1090, 0.0
    %v1687 = vmax.f32 %v1423, 0.0
    %v1688 = vmax.f32 %v1092, 0.0
    %v1689 = vmax.f32 %v1425, 0.0
    %v1690 = vmax.f32 %v1095, 0.0
    %v1691 = vmax.f32 %v1428, 0.0
    %v1692 = vmax.f32 %v1097, 0.0
    %v1693 = vmax.f32 %v1430, 0.0
    %v1694 = vmax.f32 %v1100, 0.0
    %v1695 = vmax.f32 %v1433, 0.0
    %v1696 = vmax.f32 %v1102, 0.0
    %v1697 = vmax.f32 %v1435, 0.0
    %v1698 = vmax.f32 %v1105, 0.0
    %v1699 = vmax.f32 %v1438, 0.0
    %v1700 = vmax.f32 %v1107, 0.0
    %v1701 = vmax.f32 %v1440, 0.0
    %v1702 = vmax.f32 %v1110, 0.0
    %v1703 = vmax.f32 %v1443, 0.0
    %v1704 = vpack.c.bf16 %v1448, %v1446
    %v1705 = vpack.c.bf16 %v1449, %v1447
    %v1706 = vpack.c.bf16 %v1452, %v1450
    %v1707 = vpack.c.bf16 %v1453, %v1451
    %v1708 = vpack.c.bf16 %v1456, %v1454
    %v1709 = vpack.c.bf16 %v1457, %v1455
    %v1710 = vpack.c.bf16 %v1460, %v1458
    %v1711 = vpack.c.bf16 %v1461, %v1459
    %v1712 = vpack.c.bf16 %v1464, %v1462
    %v1713 = vpack.c.bf16 %v1465, %v1463
    %v1714 = vpack.c.bf16 %v1468, %v1466
    %v1715 = vpack.c.bf16 %v1469, %v1467
    %v1716 = vpack.c.bf16 %v1472, %v1470
    %v1717 = vpack.c.bf16 %v1473, %v1471
    %v1718 = vpack.c.bf16 %v1476, %v1474
    %v1719 = vpack.c.bf16 %v1477, %v1475
    %v1720 = vpack.c.bf16 %v1480, %v1478
    %v1721 = vpack.c.bf16 %v1481, %v1479
    %v1722 = vpack.c.bf16 %v1484, %v1482
    %v1723 = vpack.c.bf16 %v1485, %v1483
    %v1724 = vpack.c.bf16 %v1488, %v1486
    %v1725 = vpack.c.bf16 %v1489, %v1487
    %v1726 = vpack.c.bf16 %v1492, %v1490
    %v1727 = vpack.c.bf16 %v1493, %v1491
    %v1728 = vpack.c.bf16 %v1496, %v1494
    %v1729 = vpack.c.bf16 %v1497, %v1495
    %v1730 = vpack.c.bf16 %v1500, %v1498
    %v1731 = vpack.c.bf16 %v1501, %v1499
    %v1732 = vpack.c.bf16 %v1504, %v1502
    %v1733 = vpack.c.bf16 %v1505, %v1503
    %v1734 = vpack.c.bf16 %v1508, %v1506
    %v1735 = vpack.c.bf16 %v1509, %v1507
    %v1736 = vpack.c.bf16 %v1512, %v1510
    %v1737 = vpack.c.bf16 %v1513, %v1511
    %v1738 = vpack.c.bf16 %v1516, %v1514
    %v1739 = vpack.c.bf16 %v1517, %v1515
    %v1740 = vpack.c.bf16 %v1520, %v1518
    %v1741 = vpack.c.bf16 %v1521, %v1519
    %v1742 = vpack.c.bf16 %v1524, %v1522
    %v1743 = vpack.c.bf16 %v1525, %v1523
    %v1744 = vpack.c.bf16 %v1528, %v1526
    %v1745 = vpack.c.bf16 %v1529, %v1527
    %v1746 = vpack.c.bf16 %v1532, %v1530
    %v1747 = vpack.c.bf16 %v1533, %v1531
    %v1748 = vpack.c.bf16 %v1536, %v1534
    %v1749 = vpack.c.bf16 %v1537, %v1535
    %v1750 = vpack.c.bf16 %v1540, %v1538
    %v1751 = vpack.c.bf16 %v1541, %v1539
    %v1752 = vpack.c.bf16 %v1544, %v1542
    %v1753 = vpack.c.bf16 %v1545, %v1543
    %v1754 = vpack.c.bf16 %v1548, %v1546
    %v1755 = vpack.c.bf16 %v1549, %v1547
    %v1756 = vpack.c.bf16 %v1552, %v1550
    %v1757 = vpack.c.bf16 %v1553, %v1551
    %v1758 = vpack.c.bf16 %v1556, %v1554
    %v1759 = vpack.c.bf16 %v1557, %v1555
    %v1760 = vpack.c.bf16 %v1560, %v1558
    %v1761 = vpack.c.bf16 %v1561, %v1559
    %v1762 = vpack.c.bf16 %v1564, %v1562
    %v1763 = vpack.c.bf16 %v1565, %v1563
    %v1764 = vpack.c.bf16 %v1568, %v1566
    %v1765 = vpack.c.bf16 %v1569, %v1567
    %v1766 = vpack.c.bf16 %v1572, %v1570
    %v1767 = vpack.c.bf16 %v1573, %v1571
    %v1768 = vpack.c.bf16 %v1576, %v1574
    %v1769 = vpack.c.bf16 %v1577, %v1575
    %v1770 = vpack.c.bf16 %v1580, %v1578
    %v1771 = vpack.c.bf16 %v1581, %v1579
    %v1772 = vpack.c.bf16 %v1584, %v1582
    %v1773 = vpack.c.bf16 %v1585, %v1583
    %v1774 = vpack.c.bf16 %v1588, %v1586
    %v1775 = vpack.c.bf16 %v1589, %v1587
    %v1776 = vpack.c.bf16 %v1592, %v1590
    %v1777 = vpack.c.bf16 %v1593, %v1591
    %v1778 = vpack.c.bf16 %v1596, %v1594
    %v1779 = vpack.c.bf16 %v1597, %v1595
    %v1780 = vpack.c.bf16 %v1600, %v1598
    %v1781 = vpack.c.bf16 %v1601, %v1599
    %v1782 = vpack.c.bf16 %v1604, %v1602
    %v1783 = vpack.c.bf16 %v1605, %v1603
    %v1784 = vpack.c.bf16 %v1608, %v1606
    %v1785 = vpack.c.bf16 %v1609, %v1607
    %v1786 = vpack.c.bf16 %v1612, %v1610
    %v1787 = vpack.c.bf16 %v1613, %v1611
    %v1788 = vpack.c.bf16 %v1616, %v1614
    %v1789 = vpack.c.bf16 %v1617, %v1615
    %v1790 = vpack.c.bf16 %v1620, %v1618
    %v1791 = vpack.c.bf16 %v1621, %v1619
    %v1792 = vpack.c.bf16 %v1624, %v1622
    %v1793 = vpack.c.bf16 %v1625, %v1623
    %v1794 = vpack.c.bf16 %v1628, %v1626
    %v1795 = vpack.c.bf16 %v1629, %v1627
    %v1796 = vpack.c.bf16 %v1632, %v1630
    %v1797 = vpack.c.bf16 %v1633, %v1631
    %v1798 = vpack.c.bf16 %v1636, %v1634
    %v1799 = vpack.c.bf16 %v1637, %v1635
    %v1800 = vpack.c.bf16 %v1640, %v1638
    %v1801 = vpack.c.bf16 %v1641, %v1639
    %v1802 = vpack.c.bf16 %v1644, %v1642
    %v1803 = vpack.c.bf16 %v1645, %v1643
    %v1804 = vpack.c.bf16 %v1648, %v1646
    %v1805 = vpack.c.bf16 %v1649, %v1647
    %v1806 = vpack.c.bf16 %v1652, %v1650
    %v1807 = vpack.c.bf16 %v1653, %v1651
    %v1808 = vpack.c.bf16 %v1656, %v1654
    %v1809 = vpack.c.bf16 %v1657, %v1655
    %v1810 = vpack.c.bf16 %v1660, %v1658
    %v1811 = vpack.c.bf16 %v1661, %v1659
    %v1812 = vpack.c.bf16 %v1664, %v1662
    %v1813 = vpack.c.bf16 %v1665, %v1663
    %v1814 = vpack.c.bf16 %v1668, %v1666
    %v1815 = vpack.c.bf16 %v1669, %v1667
    %v1816 = vpack.c.bf16 %v1672, %v1670
    %v1817 = vpack.c.bf16 %v1673, %v1671
    %v1818 = vpack.c.bf16 %v1676, %v1674
    %v1819 = vpack.c.bf16 %v1677, %v1675
    %v1820 = vpack.c.bf16 %v1680, %v1678
    %v1821 = vpack.c.bf16 %v1681, %v1679
    %v1822 = vpack.c.bf16 %v1684, %v1682
    %v1823 = vpack.c.bf16 %v1685, %v1683
    %v1824 = vpack.c.bf16 %v1688, %v1686
    %v1825 = vpack.c.bf16 %v1689, %v1687
    %v1826 = vpack.c.bf16 %v1692, %v1690
    %v1827 = vpack.c.bf16 %v1693, %v1691
    %v1828 = vpack.c.bf16 %v1696, %v1694
    %v1829 = vpack.c.bf16 %v1697, %v1695
    %v1830 = vpack.c.bf16 %v1700, %v1698
    %v1831 = vpack.c.bf16 %v1701, %v1699
    %v1832 = vpack.c.bf16 %v1702, %v1702
    %v1833 = vpack.c.bf16 %v1703, %v1703
    %v1834 = vld [vmem:[%s3] sm:$0xff]
    %v1835 = vld [vmem:[%s3 + $0x8] sm:$0xff]
    %v1836 = vld [vmem:[%s3 + $0x10] sm:$0xff]
    %v1837 = vld [vmem:[%s3 + $0x18] sm:$0xff]
    %v1838 = vld [vmem:[%s3 + $0x20] sm:$0xf]
    %v1839 = vld [vmem:[%s3 + $0x24] sm:$0xff]
    %v1840 = vld [vmem:[%s3 + $0x2c] sm:$0xff]
    %v1841 = vld [vmem:[%s3 + $0x34] sm:$0xff]
    %v1842 = vld [vmem:[%s3 + $0x3c] sm:$0xff]
    %v1843 = vld [vmem:[%s3 + $0x44] sm:$0xf]
    %v1844 = vld [vmem:[%s3 + $0x48] sm:$0xff]
    %v1845 = vld [vmem:[%s3 + $0x50] sm:$0xff]
    %v1846 = vld [vmem:[%s3 + $0x58] sm:$0xff]
    %v1847 = vld [vmem:[%s3 + $0x60] sm:$0xff]
    %v1848 = vld [vmem:[%s3 + $0x68] sm:$0xf]
    %v1849 = vld [vmem:[%s3 + $0x6c] sm:$0xff]
    %v1850 = vld [vmem:[%s3 + $0x74] sm:$0xff]
    %v1851 = vld [vmem:[%s3 + $0x7c] sm:$0xff]
    %v1852 = vld [vmem:[%s3 + $0x84] sm:$0xff]
    %v1853 = vld [vmem:[%s3 + $0x8c] sm:$0xf]
    %v1854 = vld [vmem:[%s3 + $0x90] sm:$0xff]
    %v1855 = vld [vmem:[%s3 + $0x98] sm:$0xff]
    %v1856 = vld [vmem:[%s3 + $0xa0] sm:$0xff]
    %v1857 = vld [vmem:[%s3 + $0xa8] sm:$0xff]
    %v1858 = vld [vmem:[%s3 + $0xb0] sm:$0xf]
    %v1859 = vld [vmem:[%s3 + $0xb4] sm:$0xff]
    %v1860 = vld [vmem:[%s3 + $0xbc] sm:$0xff]
    %v1861 = vld [vmem:[%s3 + $0xc4] sm:$0xff]
    %v1862 = vld [vmem:[%s3 + $0xcc] sm:$0xff]
    %v1863 = vld [vmem:[%s3 + $0xd4] sm:$0xf]
    %v1864 = vld [vmem:[%s3 + $0xd8] sm:$0xff]
    %v1865 = vld [vmem:[%s3 + $0xe0] sm:$0xff]
    %v1866 = vld [vmem:[%s3 + $0xe8] sm:$0xff]
    %v1867 = vld [vmem:[%s3 + $0xf0] sm:$0xff]
    %v1868 = vld [vmem:[%s3 + $0xf8] sm:$0xf]
    %v1869 = vld [vmem:[%s3 + $0xfc] sm:$0xff]
    %v1870 = vld [vmem:[%s3 + $0x104] sm:$0xff]
    %v1871 = vld [vmem:[%s3 + $0x10c] sm:$0xff]
    %v1872 = vld [vmem:[%s3 + $0x114] sm:$0xff]
    %v1873 = vld [vmem:[%s3 + $0x11c] sm:$0xf]
    %v1874 = vld [vmem:[%s3 + $0x120] sm:$0xff]
    %v1875 = vld [vmem:[%s3 + $0x128] sm:$0xff]
    %v1876 = vld [vmem:[%s3 + $0x130] sm:$0xff]
    %v1877 = vld [vmem:[%s3 + $0x138] sm:$0xff]
    %v1878 = vld [vmem:[%s3 + $0x140] sm:$0xf]
    %v1879 = vld [vmem:[%s3 + $0x144] sm:$0xff]
    %v1880 = vld [vmem:[%s3 + $0x14c] sm:$0xff]
    %v1881 = vld [vmem:[%s3 + $0x154] sm:$0xff]
    %v1882 = vld [vmem:[%s3 + $0x15c] sm:$0xff]
    %v1883 = vld [vmem:[%s3 + $0x164] sm:$0xf]
    %v1884 = vld [vmem:[%s3 + $0x168] sm:$0xff]
    %v1885 = vld [vmem:[%s3 + $0x170] sm:$0xff]
    %v1886 = vld [vmem:[%s3 + $0x178] sm:$0xff]
    %v1887 = vld [vmem:[%s3 + $0x180] sm:$0xff]
    %v1888 = vld [vmem:[%s3 + $0x188] sm:$0xf]
    %v1889 = vld [vmem:[%s3 + $0x18c] sm:$0xff]
    %v1890 = vld [vmem:[%s3 + $0x194] sm:$0xff]
    %v1891 = vld [vmem:[%s3 + $0x19c] sm:$0xff]
    %v1892 = vld [vmem:[%s3 + $0x1a4] sm:$0xff]
    %v1893 = vld [vmem:[%s3 + $0x1ac] sm:$0xf]
    %v1894 = vld [vmem:[%s3 + $0x1b0] sm:$0xff]
    %v1895 = vld [vmem:[%s3 + $0x1b8] sm:$0xff]
    %v1896 = vld [vmem:[%s3 + $0x1c0] sm:$0xff]
    %v1897 = vld [vmem:[%s3 + $0x1c8] sm:$0xff]
    %v1898 = vld [vmem:[%s3 + $0x1d0] sm:$0xf]
    %v1899 = vld [vmem:[%s3 + $0x1d4] sm:$0xff]
    %v1900 = vld [vmem:[%s3 + $0x1dc] sm:$0xff]
    %v1901 = vld [vmem:[%s3 + $0x1e4] sm:$0xff]
    %v1902 = vld [vmem:[%s3 + $0x1ec] sm:$0xff]
    %v1903 = vld [vmem:[%s3 + $0x1f4] sm:$0xf]
    %v1904 = vld [vmem:[%s3 + $0x1f8] sm:$0xff]
    %v1905 = vld [vmem:[%s3 + $0x200] sm:$0xff]
    %v1906 = vld [vmem:[%s3 + $0x208] sm:$0xff]
    %v1907 = vld [vmem:[%s3 + $0x210] sm:$0xff]
    %v1908 = vld [vmem:[%s3 + $0x218] sm:$0xf]
    %v1909 = vld [vmem:[%s3 + $0x21c] sm:$0xff]
    %v1910 = vld [vmem:[%s3 + $0x224] sm:$0xff]
    %v1911 = vld [vmem:[%s3 + $0x22c] sm:$0xff]
    %v1912 = vld [vmem:[%s3 + $0x234] sm:$0xff]
    %v1913 = vld [vmem:[%s3 + $0x23c] sm:$0xf]
    %v1994 = vunpack.c.l.b16 %v1834
    %v1995 = vunpack.c.h.b16 %v1834
    %v1996 = vunpack.c.l.b16 %v1835
    %v1997 = vunpack.c.h.b16 %v1835
    %v1998 = vunpack.c.l.b16 %v1836
    %v1999 = vunpack.c.h.b16 %v1836
    %v2000 = vunpack.c.l.b16 %v1837
    %v2001 = vunpack.c.h.b16 %v1837
    %v2002 = vunpack.c.l.b16 %v1838
    %v2003 = vunpack.c.l.b16 %v1839
    %v2004 = vunpack.c.h.b16 %v1839
    %v2005 = vunpack.c.l.b16 %v1840
    %v2006 = vunpack.c.h.b16 %v1840
    %v2007 = vunpack.c.l.b16 %v1841
    %v2008 = vunpack.c.h.b16 %v1841
    %v2009 = vunpack.c.l.b16 %v1842
    %v2010 = vunpack.c.h.b16 %v1842
    %v2011 = vunpack.c.l.b16 %v1843
    %v2012 = vunpack.c.l.b16 %v1844
    %v2013 = vunpack.c.h.b16 %v1844
    %v2014 = vunpack.c.l.b16 %v1845
    %v2015 = vunpack.c.h.b16 %v1845
    %v2016 = vunpack.c.l.b16 %v1846
    %v2017 = vunpack.c.h.b16 %v1846
    %v2018 = vunpack.c.l.b16 %v1847
    %v2019 = vunpack.c.h.b16 %v1847
    %v2020 = vunpack.c.l.b16 %v1848
    %v2021 = vunpack.c.l.b16 %v1849
    %v2022 = vunpack.c.h.b16 %v1849
    %v2023 = vunpack.c.l.b16 %v1850
    %v2024 = vunpack.c.h.b16 %v1850
    %v2025 = vunpack.c.l.b16 %v1851
    %v2026 = vunpack.c.h.b16 %v1851
    %v2027 = vunpack.c.l.b16 %v1852
    %v2028 = vunpack.c.h.b16 %v1852
    %v2029 = vunpack.c.l.b16 %v1853
    %v2030 = vunpack.c.l.b16 %v1854
    %v2031 = vunpack.c.h.b16 %v1854
    %v2032 = vunpack.c.l.b16 %v1855
    %v2033 = vunpack.c.h.b16 %v1855
    %v2034 = vunpack.c.l.b16 %v1856
    %v2035 = vunpack.c.h.b16 %v1856
    %v2036 = vunpack.c.l.b16 %v1857
    %v2037 = vunpack.c.h.b16 %v1857
    %v2038 = vunpack.c.l.b16 %v1858
    %v2039 = vunpack.c.l.b16 %v1859
    %v2040 = vunpack.c.h.b16 %v1859
    %v2041 = vunpack.c.l.b16 %v1860
    %v2042 = vunpack.c.h.b16 %v1860
    %v2043 = vunpack.c.l.b16 %v1861
    %v2044 = vunpack.c.h.b16 %v1861
    %v2045 = vunpack.c.l.b16 %v1862
    %v2046 = vunpack.c.h.b16 %v1862
    %v2047 = vunpack.c.l.b16 %v1863
    %v2048 = vunpack.c.l.b16 %v1864
    %v2049 = vunpack.c.h.b16 %v1864
    %v2050 = vunpack.c.l.b16 %v1865
    %v2051 = vunpack.c.h.b16 %v1865
    %v2052 = vunpack.c.l.b16 %v1866
    %v2053 = vunpack.c.h.b16 %v1866
    %v2054 = vunpack.c.l.b16 %v1867
    %v2055 = vunpack.c.h.b16 %v1867
    %v2056 = vunpack.c.l.b16 %v1868
    %v2057 = vunpack.c.l.b16 %v1869
    %v2058 = vunpack.c.h.b16 %v1869
    %v2059 = vunpack.c.l.b16 %v1870
    %v2060 = vunpack.c.h.b16 %v1870
    %v2061 = vunpack.c.l.b16 %v1871
    %v2062 = vunpack.c.h.b16 %v1871
    %v2063 = vunpack.c.l.b16 %v1872
    %v2064 = vunpack.c.h.b16 %v1872
    %v2065 = vunpack.c.l.b16 %v1873
    %v2066 = vunpack.c.l.b16 %v1874
    %v2067 = vunpack.c.h.b16 %v1874
    %v2068 = vunpack.c.l.b16 %v1875
    %v2069 = vunpack.c.h.b16 %v1875
    %v2070 = vunpack.c.l.b16 %v1876
    %v2071 = vunpack.c.h.b16 %v1876
    %v2072 = vunpack.c.l.b16 %v1877
    %v2073 = vunpack.c.h.b16 %v1877
    %v2074 = vunpack.c.l.b16 %v1878
    %v2075 = vunpack.c.l.b16 %v1879
    %v2076 = vunpack.c.h.b16 %v1879
    %v2077 = vunpack.c.l.b16 %v1880
    %v2078 = vunpack.c.h.b16 %v1880
    %v2079 = vunpack.c.l.b16 %v1881
    %v2080 = vunpack.c.h.b16 %v1881
    %v2081 = vunpack.c.l.b16 %v1882
    %v2082 = vunpack.c.h.b16 %v1882
    %v2083 = vunpack.c.l.b16 %v1883
    %v2084 = vunpack.c.l.b16 %v1884
    %v2085 = vunpack.c.h.b16 %v1884
    %v2086 = vunpack.c.l.b16 %v1885
    %v2087 = vunpack.c.h.b16 %v1885
    %v2088 = vunpack.c.l.b16 %v1886
    %v2089 = vunpack.c.h.b16 %v1886
    %v2090 = vunpack.c.l.b16 %v1887
    %v2091 = vunpack.c.h.b16 %v1887
    %v2092 = vunpack.c.l.b16 %v1888
    %v2093 = vunpack.c.l.b16 %v1889
    %v2094 = vunpack.c.h.b16 %v1889
    %v2095 = vunpack.c.l.b16 %v1890
    %v2096 = vunpack.c.h.b16 %v1890
    %v2097 = vunpack.c.l.b16 %v1891
    %v2098 = vunpack.c.h.b16 %v1891
    %v2099 = vunpack.c.l.b16 %v1892
    %v2100 = vunpack.c.h.b16 %v1892
    %v2101 = vunpack.c.l.b16 %v1893
    %v2102 = vunpack.c.l.b16 %v1894
    %v2103 = vunpack.c.h.b16 %v1894
    %v2104 = vunpack.c.l.b16 %v1895
    %v2105 = vunpack.c.h.b16 %v1895
    %v2106 = vunpack.c.l.b16 %v1896
    %v2107 = vunpack.c.h.b16 %v1896
    %v2108 = vunpack.c.l.b16 %v1897
    %v2109 = vunpack.c.h.b16 %v1897
    %v2110 = vunpack.c.l.b16 %v1898
    %v2111 = vunpack.c.l.b16 %v1899
    %v2112 = vunpack.c.h.b16 %v1899
    %v2113 = vunpack.c.l.b16 %v1900
    %v2114 = vunpack.c.h.b16 %v1900
    %v2115 = vunpack.c.l.b16 %v1901
    %v2116 = vunpack.c.h.b16 %v1901
    %v2117 = vunpack.c.l.b16 %v1902
    %v2118 = vunpack.c.h.b16 %v1902
    %v2119 = vunpack.c.l.b16 %v1903
    %v2120 = vunpack.c.l.b16 %v1904
    %v2121 = vunpack.c.h.b16 %v1904
    %v2122 = vunpack.c.l.b16 %v1905
    %v2123 = vunpack.c.h.b16 %v1905
    %v2124 = vunpack.c.l.b16 %v1906
    %v2125 = vunpack.c.h.b16 %v1906
    %v2126 = vunpack.c.l.b16 %v1907
    %v2127 = vunpack.c.h.b16 %v1907
    %v2128 = vunpack.c.l.b16 %v1908
    %v2129 = vunpack.c.l.b16 %v1909
    %v2130 = vunpack.c.h.b16 %v1909
    %v2131 = vunpack.c.l.b16 %v1910
    %v2132 = vunpack.c.h.b16 %v1910
    %v2133 = vunpack.c.l.b16 %v1911
    %v2134 = vunpack.c.h.b16 %v1911
    %v2135 = vunpack.c.l.b16 %v1912
    %v2136 = vunpack.c.h.b16 %v1912
    %v2137 = vunpack.c.l.b16 %v1913
    %v2138 = vpack.c.b16 %v2003, %v1994
    %v2139 = vpack.c.b16 %v2004, %v1995
    %v2140 = vpack.c.b16 %v2005, %v1996
    %v2141 = vpack.c.b16 %v2006, %v1997
    %v2142 = vpack.c.b16 %v2007, %v1998
    %v2143 = vpack.c.b16 %v2008, %v1999
    %v2144 = vpack.c.b16 %v2009, %v2000
    %v2145 = vpack.c.b16 %v2010, %v2001
    %v2146 = vpack.c.b16 %v2011, %v2002
    %v2147 = vpack.c.b16 %v2021, %v2012
    %v2148 = vpack.c.b16 %v2022, %v2013
    %v2149 = vpack.c.b16 %v2023, %v2014
    %v2150 = vpack.c.b16 %v2024, %v2015
    %v2151 = vpack.c.b16 %v2025, %v2016
    %v2152 = vpack.c.b16 %v2026, %v2017
    %v2153 = vpack.c.b16 %v2027, %v2018
    %v2154 = vpack.c.b16 %v2028, %v2019
    %v2155 = vpack.c.b16 %v2029, %v2020
    %v2156 = vpack.c.b16 %v2039, %v2030
    %v2157 = vpack.c.b16 %v2040, %v2031
    %v2158 = vpack.c.b16 %v2041, %v2032
    %v2159 = vpack.c.b16 %v2042, %v2033
    %v2160 = vpack.c.b16 %v2043, %v2034
    %v2161 = vpack.c.b16 %v2044, %v2035
    %v2162 = vpack.c.b16 %v2045, %v2036
    %v2163 = vpack.c.b16 %v2046, %v2037
    %v2164 = vpack.c.b16 %v2047, %v2038
    %v2165 = vpack.c.b16 %v2057, %v2048
    %v2166 = vpack.c.b16 %v2058, %v2049
    %v2167 = vpack.c.b16 %v2059, %v2050
    %v2168 = vpack.c.b16 %v2060, %v2051
    %v2169 = vpack.c.b16 %v2061, %v2052
    %v2170 = vpack.c.b16 %v2062, %v2053
    %v2171 = vpack.c.b16 %v2063, %v2054
    %v2172 = vpack.c.b16 %v2064, %v2055
    %v2173 = vpack.c.b16 %v2065, %v2056
    %v2174 = vpack.c.b16 %v2075, %v2066
    %v2175 = vpack.c.b16 %v2076, %v2067
    %v2176 = vpack.c.b16 %v2077, %v2068
    %v2177 = vpack.c.b16 %v2078, %v2069
    %v2178 = vpack.c.b16 %v2079, %v2070
    %v2179 = vpack.c.b16 %v2080, %v2071
    %v2180 = vpack.c.b16 %v2081, %v2072
    %v2181 = vpack.c.b16 %v2082, %v2073
    %v2182 = vpack.c.b16 %v2083, %v2074
    %v2183 = vpack.c.b16 %v2093, %v2084
    %v2184 = vpack.c.b16 %v2094, %v2085
    %v2185 = vpack.c.b16 %v2095, %v2086
    %v2186 = vpack.c.b16 %v2096, %v2087
    %v2187 = vpack.c.b16 %v2097, %v2088
    %v2188 = vpack.c.b16 %v2098, %v2089
    %v2189 = vpack.c.b16 %v2099, %v2090
    %v2190 = vpack.c.b16 %v2100, %v2091
    %v2191 = vpack.c.b16 %v2101, %v2092
    %v2192 = vpack.c.b16 %v2111, %v2102
    %v2193 = vpack.c.b16 %v2112, %v2103
    %v2194 = vpack.c.b16 %v2113, %v2104
    %v2195 = vpack.c.b16 %v2114, %v2105
    %v2196 = vpack.c.b16 %v2115, %v2106
    %v2197 = vpack.c.b16 %v2116, %v2107
    %v2198 = vpack.c.b16 %v2117, %v2108
    %v2199 = vpack.c.b16 %v2118, %v2109
    %v2200 = vpack.c.b16 %v2119, %v2110
    %v2201 = vpack.c.b16 %v2129, %v2120
    %v2202 = vpack.c.b16 %v2130, %v2121
    %v2203 = vpack.c.b16 %v2131, %v2122
    %v2204 = vpack.c.b16 %v2132, %v2123
    %v2205 = vpack.c.b16 %v2133, %v2124
    %v2206 = vpack.c.b16 %v2134, %v2125
    %v2207 = vpack.c.b16 %v2135, %v2126
    %v2208 = vpack.c.b16 %v2136, %v2127
    %v2209 = vpack.c.b16 %v2137, %v2128
    %vm2274 = vcmask 64512
    %v2276 = vsel %vm2274, %v2146, 0
    %v2279 = vsel %vm2274, %v2155, 0
    %v2282 = vsel %vm2274, %v2164, 0
    %v2285 = vsel %vm2274, %v2173, 0
    %v2288 = vsel %vm2274, %v2182, 0
    %v2291 = vsel %vm2274, %v2191, 0
    %v2294 = vsel %vm2274, %v2200, 0
    %v2297 = vsel %vm2274, %v2209, 0
    %vm2299 = vcmask 1043456
    %v2301 = vsel %vm2299, %v1832, 0
    %v2304 = vsel %vm2299, %v1833, 0
    %2306 = vmatpush.bf16.msra.mxu0 %v1718
    %2307 = vmatpush.bf16.msra.mxu0 %v1716
    %2308 = vmatpush.bf16.msra.mxu0 %v1714
    %2309 = vmatpush.bf16.msra.mxu0 %v1712
    %2310 = vmatpush.bf16.msra.mxu0 %v1710
    %2311 = vmatpush.bf16.msra.mxu0 %v1708
    %2312 = vmatpush.bf16.msra.mxu0 %v1706
    %2313 = vmatpush.bf16.msra.mxu0 %v1704
    %2314 = vmatmul.bf16.gmra.mxu0 %v2138
    %v2315 = vpop.f32.mrf.mxu0
    %v2316 = vadd.f32 0.0, %v2315
    %v2317 = vpop.f32.mrf.mxu0
    %v2318 = vadd.f32 0.0, %v2317
    %2319 = vmatmul.bf16.gmra.mxu0 %v2147
    %v2320 = vpop.f32.mrf.mxu0
    %v2321 = vadd.f32 0.0, %v2320
    %v2322 = vpop.f32.mrf.mxu0
    %v2323 = vadd.f32 0.0, %v2322
    %2324 = vmatmul.bf16.gmra.mxu0 %v2156
    %v2325 = vpop.f32.mrf.mxu0
    %v2326 = vadd.f32 0.0, %v2325
    %v2327 = vpop.f32.mrf.mxu0
    %v2328 = vadd.f32 0.0, %v2327
    %2329 = vmatmul.bf16.gmra.mxu0 %v2165
    %v2330 = vpop.f32.mrf.mxu0
    %v2331 = vadd.f32 0.0, %v2330
    %v2332 = vpop.f32.mrf.mxu0
    %v2333 = vadd.f32 0.0, %v2332
    %2334 = vmatmul.bf16.gmra.mxu0 %v2174
    %v2335 = vpop.f32.mrf.mxu0
    %v2336 = vadd.f32 0.0, %v2335
    %v2337 = vpop.f32.mrf.mxu0
    %v2338 = vadd.f32 0.0, %v2337
    %2339 = vmatmul.bf16.gmra.mxu0 %v2183
    %v2340 = vpop.f32.mrf.mxu0
    %v2341 = vadd.f32 0.0, %v2340
    %v2342 = vpop.f32.mrf.mxu0
    %v2343 = vadd.f32 0.0, %v2342
    %2344 = vmatmul.bf16.gmra.mxu0 %v2192
    %v2345 = vpop.f32.mrf.mxu0
    %v2346 = vadd.f32 0.0, %v2345
    %v2347 = vpop.f32.mrf.mxu0
    %v2348 = vadd.f32 0.0, %v2347
    %2349 = vmatmul.bf16.gmra.mxu0 %v2201
    %v2350 = vpop.f32.mrf.mxu0
    %v2351 = vadd.f32 0.0, %v2350
    %v2352 = vpop.f32.mrf.mxu0
    %v2353 = vadd.f32 0.0, %v2352
    %2354 = vdwg.mxu0
    %2355 = vmatpush.bf16.msra.mxu0 %v1734
    %2356 = vmatpush.bf16.msra.mxu0 %v1732
    %2357 = vmatpush.bf16.msra.mxu0 %v1730
    %2358 = vmatpush.bf16.msra.mxu0 %v1728
    %2359 = vmatpush.bf16.msra.mxu0 %v1726
    %2360 = vmatpush.bf16.msra.mxu0 %v1724
    %2361 = vmatpush.bf16.msra.mxu0 %v1722
    %2362 = vmatpush.bf16.msra.mxu0 %v1720
    %2363 = vmatmul.bf16.gmra.mxu0 %v2139
    %v2364 = vpop.f32.mrf.mxu0
    %v2365 = vadd.f32 %v2316, %v2364
    %v2366 = vpop.f32.mrf.mxu0
    %v2367 = vadd.f32 %v2318, %v2366
    %2368 = vmatmul.bf16.gmra.mxu0 %v2148
    %v2369 = vpop.f32.mrf.mxu0
    %v2370 = vadd.f32 %v2321, %v2369
    %v2371 = vpop.f32.mrf.mxu0
    %v2372 = vadd.f32 %v2323, %v2371
    %2373 = vmatmul.bf16.gmra.mxu0 %v2157
    %v2374 = vpop.f32.mrf.mxu0
    %v2375 = vadd.f32 %v2326, %v2374
    %v2376 = vpop.f32.mrf.mxu0
    %v2377 = vadd.f32 %v2328, %v2376
    %2378 = vmatmul.bf16.gmra.mxu0 %v2166
    %v2379 = vpop.f32.mrf.mxu0
    %v2380 = vadd.f32 %v2331, %v2379
    %v2381 = vpop.f32.mrf.mxu0
    %v2382 = vadd.f32 %v2333, %v2381
    %2383 = vmatmul.bf16.gmra.mxu0 %v2175
    %v2384 = vpop.f32.mrf.mxu0
    %v2385 = vadd.f32 %v2336, %v2384
    %v2386 = vpop.f32.mrf.mxu0
    %v2387 = vadd.f32 %v2338, %v2386
    %2388 = vmatmul.bf16.gmra.mxu0 %v2184
    %v2389 = vpop.f32.mrf.mxu0
    %v2390 = vadd.f32 %v2341, %v2389
    %v2391 = vpop.f32.mrf.mxu0
    %v2392 = vadd.f32 %v2343, %v2391
    %2393 = vmatmul.bf16.gmra.mxu0 %v2193
    %v2394 = vpop.f32.mrf.mxu0
    %v2395 = vadd.f32 %v2346, %v2394
    %v2396 = vpop.f32.mrf.mxu0
    %v2397 = vadd.f32 %v2348, %v2396
    %2398 = vmatmul.bf16.gmra.mxu0 %v2202
    %v2399 = vpop.f32.mrf.mxu0
    %v2400 = vadd.f32 %v2351, %v2399
    %v2401 = vpop.f32.mrf.mxu0
    %v2402 = vadd.f32 %v2353, %v2401
    %2403 = vdwg.mxu0
    %2404 = vmatpush.bf16.msra.mxu0 %v1750
    %2405 = vmatpush.bf16.msra.mxu0 %v1748
    %2406 = vmatpush.bf16.msra.mxu0 %v1746
    %2407 = vmatpush.bf16.msra.mxu0 %v1744
    %2408 = vmatpush.bf16.msra.mxu0 %v1742
    %2409 = vmatpush.bf16.msra.mxu0 %v1740
    %2410 = vmatpush.bf16.msra.mxu0 %v1738
    %2411 = vmatpush.bf16.msra.mxu0 %v1736
    %2412 = vmatmul.bf16.gmra.mxu0 %v2140
    %v2413 = vpop.f32.mrf.mxu0
    %v2414 = vadd.f32 %v2365, %v2413
    %v2415 = vpop.f32.mrf.mxu0
    %v2416 = vadd.f32 %v2367, %v2415
    %2417 = vmatmul.bf16.gmra.mxu0 %v2149
    %v2418 = vpop.f32.mrf.mxu0
    %v2419 = vadd.f32 %v2370, %v2418
    %v2420 = vpop.f32.mrf.mxu0
    %v2421 = vadd.f32 %v2372, %v2420
    %2422 = vmatmul.bf16.gmra.mxu0 %v2158
    %v2423 = vpop.f32.mrf.mxu0
    %v2424 = vadd.f32 %v2375, %v2423
    %v2425 = vpop.f32.mrf.mxu0
    %v2426 = vadd.f32 %v2377, %v2425
    %2427 = vmatmul.bf16.gmra.mxu0 %v2167
    %v2428 = vpop.f32.mrf.mxu0
    %v2429 = vadd.f32 %v2380, %v2428
    %v2430 = vpop.f32.mrf.mxu0
    %v2431 = vadd.f32 %v2382, %v2430
    %2432 = vmatmul.bf16.gmra.mxu0 %v2176
    %v2433 = vpop.f32.mrf.mxu0
    %v2434 = vadd.f32 %v2385, %v2433
    %v2435 = vpop.f32.mrf.mxu0
    %v2436 = vadd.f32 %v2387, %v2435
    %2437 = vmatmul.bf16.gmra.mxu0 %v2185
    %v2438 = vpop.f32.mrf.mxu0
    %v2439 = vadd.f32 %v2390, %v2438
    %v2440 = vpop.f32.mrf.mxu0
    %v2441 = vadd.f32 %v2392, %v2440
    %2442 = vmatmul.bf16.gmra.mxu0 %v2194
    %v2443 = vpop.f32.mrf.mxu0
    %v2444 = vadd.f32 %v2395, %v2443
    %v2445 = vpop.f32.mrf.mxu0
    %v2446 = vadd.f32 %v2397, %v2445
    %2447 = vmatmul.bf16.gmra.mxu0 %v2203
    %v2448 = vpop.f32.mrf.mxu0
    %v2449 = vadd.f32 %v2400, %v2448
    %v2450 = vpop.f32.mrf.mxu0
    %v2451 = vadd.f32 %v2402, %v2450
    %2452 = vdwg.mxu0
    %2453 = vmatpush.bf16.msra.mxu0 %v1766
    %2454 = vmatpush.bf16.msra.mxu0 %v1764
    %2455 = vmatpush.bf16.msra.mxu0 %v1762
    %2456 = vmatpush.bf16.msra.mxu0 %v1760
    %2457 = vmatpush.bf16.msra.mxu0 %v1758
    %2458 = vmatpush.bf16.msra.mxu0 %v1756
    %2459 = vmatpush.bf16.msra.mxu0 %v1754
    %2460 = vmatpush.bf16.msra.mxu0 %v1752
    %2461 = vmatmul.bf16.gmra.mxu0 %v2141
    %v2462 = vpop.f32.mrf.mxu0
    %v2463 = vadd.f32 %v2414, %v2462
    %v2464 = vpop.f32.mrf.mxu0
    %v2465 = vadd.f32 %v2416, %v2464
    %2466 = vmatmul.bf16.gmra.mxu0 %v2150
    %v2467 = vpop.f32.mrf.mxu0
    %v2468 = vadd.f32 %v2419, %v2467
    %v2469 = vpop.f32.mrf.mxu0
    %v2470 = vadd.f32 %v2421, %v2469
    %2471 = vmatmul.bf16.gmra.mxu0 %v2159
    %v2472 = vpop.f32.mrf.mxu0
    %v2473 = vadd.f32 %v2424, %v2472
    %v2474 = vpop.f32.mrf.mxu0
    %v2475 = vadd.f32 %v2426, %v2474
    %2476 = vmatmul.bf16.gmra.mxu0 %v2168
    %v2477 = vpop.f32.mrf.mxu0
    %v2478 = vadd.f32 %v2429, %v2477
    %v2479 = vpop.f32.mrf.mxu0
    %v2480 = vadd.f32 %v2431, %v2479
    %2481 = vmatmul.bf16.gmra.mxu0 %v2177
    %v2482 = vpop.f32.mrf.mxu0
    %v2483 = vadd.f32 %v2434, %v2482
    %v2484 = vpop.f32.mrf.mxu0
    %v2485 = vadd.f32 %v2436, %v2484
    %2486 = vmatmul.bf16.gmra.mxu0 %v2186
    %v2487 = vpop.f32.mrf.mxu0
    %v2488 = vadd.f32 %v2439, %v2487
    %v2489 = vpop.f32.mrf.mxu0
    %v2490 = vadd.f32 %v2441, %v2489
    %2491 = vmatmul.bf16.gmra.mxu0 %v2195
    %v2492 = vpop.f32.mrf.mxu0
    %v2493 = vadd.f32 %v2444, %v2492
    %v2494 = vpop.f32.mrf.mxu0
    %v2495 = vadd.f32 %v2446, %v2494
    %2496 = vmatmul.bf16.gmra.mxu0 %v2204
    %v2497 = vpop.f32.mrf.mxu0
    %v2498 = vadd.f32 %v2449, %v2497
    %v2499 = vpop.f32.mrf.mxu0
    %v2500 = vadd.f32 %v2451, %v2499
    %2501 = vdwg.mxu0
    %2502 = vmatpush.bf16.msra.mxu0 %v1782
    %2503 = vmatpush.bf16.msra.mxu0 %v1780
    %2504 = vmatpush.bf16.msra.mxu0 %v1778
    %2505 = vmatpush.bf16.msra.mxu0 %v1776
    %2506 = vmatpush.bf16.msra.mxu0 %v1774
    %2507 = vmatpush.bf16.msra.mxu0 %v1772
    %2508 = vmatpush.bf16.msra.mxu0 %v1770
    %2509 = vmatpush.bf16.msra.mxu0 %v1768
    %2510 = vmatmul.bf16.gmra.mxu0 %v2142
    %v2511 = vpop.f32.mrf.mxu0
    %v2512 = vadd.f32 %v2463, %v2511
    %v2513 = vpop.f32.mrf.mxu0
    %v2514 = vadd.f32 %v2465, %v2513
    %2515 = vmatmul.bf16.gmra.mxu0 %v2151
    %v2516 = vpop.f32.mrf.mxu0
    %v2517 = vadd.f32 %v2468, %v2516
    %v2518 = vpop.f32.mrf.mxu0
    %v2519 = vadd.f32 %v2470, %v2518
    %2520 = vmatmul.bf16.gmra.mxu0 %v2160
    %v2521 = vpop.f32.mrf.mxu0
    %v2522 = vadd.f32 %v2473, %v2521
    %v2523 = vpop.f32.mrf.mxu0
    %v2524 = vadd.f32 %v2475, %v2523
    %2525 = vmatmul.bf16.gmra.mxu0 %v2169
    %v2526 = vpop.f32.mrf.mxu0
    %v2527 = vadd.f32 %v2478, %v2526
    %v2528 = vpop.f32.mrf.mxu0
    %v2529 = vadd.f32 %v2480, %v2528
    %2530 = vmatmul.bf16.gmra.mxu0 %v2178
    %v2531 = vpop.f32.mrf.mxu0
    %v2532 = vadd.f32 %v2483, %v2531
    %v2533 = vpop.f32.mrf.mxu0
    %v2534 = vadd.f32 %v2485, %v2533
    %2535 = vmatmul.bf16.gmra.mxu0 %v2187
    %v2536 = vpop.f32.mrf.mxu0
    %v2537 = vadd.f32 %v2488, %v2536
    %v2538 = vpop.f32.mrf.mxu0
    %v2539 = vadd.f32 %v2490, %v2538
    %2540 = vmatmul.bf16.gmra.mxu0 %v2196
    %v2541 = vpop.f32.mrf.mxu0
    %v2542 = vadd.f32 %v2493, %v2541
    %v2543 = vpop.f32.mrf.mxu0
    %v2544 = vadd.f32 %v2495, %v2543
    %2545 = vmatmul.bf16.gmra.mxu0 %v2205
    %v2546 = vpop.f32.mrf.mxu0
    %v2547 = vadd.f32 %v2498, %v2546
    %v2548 = vpop.f32.mrf.mxu0
    %v2549 = vadd.f32 %v2500, %v2548
    %2550 = vdwg.mxu0
    %2551 = vmatpush.bf16.msra.mxu0 %v1798
    %2552 = vmatpush.bf16.msra.mxu0 %v1796
    %2553 = vmatpush.bf16.msra.mxu0 %v1794
    %2554 = vmatpush.bf16.msra.mxu0 %v1792
    %2555 = vmatpush.bf16.msra.mxu0 %v1790
    %2556 = vmatpush.bf16.msra.mxu0 %v1788
    %2557 = vmatpush.bf16.msra.mxu0 %v1786
    %2558 = vmatpush.bf16.msra.mxu0 %v1784
    %2559 = vmatmul.bf16.gmra.mxu0 %v2143
    %v2560 = vpop.f32.mrf.mxu0
    %v2561 = vadd.f32 %v2512, %v2560
    %v2562 = vpop.f32.mrf.mxu0
    %v2563 = vadd.f32 %v2514, %v2562
    %2564 = vmatmul.bf16.gmra.mxu0 %v2152
    %v2565 = vpop.f32.mrf.mxu0
    %v2566 = vadd.f32 %v2517, %v2565
    %v2567 = vpop.f32.mrf.mxu0
    %v2568 = vadd.f32 %v2519, %v2567
    %2569 = vmatmul.bf16.gmra.mxu0 %v2161
    %v2570 = vpop.f32.mrf.mxu0
    %v2571 = vadd.f32 %v2522, %v2570
    %v2572 = vpop.f32.mrf.mxu0
    %v2573 = vadd.f32 %v2524, %v2572
    %2574 = vmatmul.bf16.gmra.mxu0 %v2170
    %v2575 = vpop.f32.mrf.mxu0
    %v2576 = vadd.f32 %v2527, %v2575
    %v2577 = vpop.f32.mrf.mxu0
    %v2578 = vadd.f32 %v2529, %v2577
    %2579 = vmatmul.bf16.gmra.mxu0 %v2179
    %v2580 = vpop.f32.mrf.mxu0
    %v2581 = vadd.f32 %v2532, %v2580
    %v2582 = vpop.f32.mrf.mxu0
    %v2583 = vadd.f32 %v2534, %v2582
    %2584 = vmatmul.bf16.gmra.mxu0 %v2188
    %v2585 = vpop.f32.mrf.mxu0
    %v2586 = vadd.f32 %v2537, %v2585
    %v2587 = vpop.f32.mrf.mxu0
    %v2588 = vadd.f32 %v2539, %v2587
    %2589 = vmatmul.bf16.gmra.mxu0 %v2197
    %v2590 = vpop.f32.mrf.mxu0
    %v2591 = vadd.f32 %v2542, %v2590
    %v2592 = vpop.f32.mrf.mxu0
    %v2593 = vadd.f32 %v2544, %v2592
    %2594 = vmatmul.bf16.gmra.mxu0 %v2206
    %v2595 = vpop.f32.mrf.mxu0
    %v2596 = vadd.f32 %v2547, %v2595
    %v2597 = vpop.f32.mrf.mxu0
    %v2598 = vadd.f32 %v2549, %v2597
    %2599 = vdwg.mxu0
    %2600 = vmatpush.bf16.msra.mxu0 %v1814
    %2601 = vmatpush.bf16.msra.mxu0 %v1812
    %2602 = vmatpush.bf16.msra.mxu0 %v1810
    %2603 = vmatpush.bf16.msra.mxu0 %v1808
    %2604 = vmatpush.bf16.msra.mxu0 %v1806
    %2605 = vmatpush.bf16.msra.mxu0 %v1804
    %2606 = vmatpush.bf16.msra.mxu0 %v1802
    %2607 = vmatpush.bf16.msra.mxu0 %v1800
    %2608 = vmatmul.bf16.gmra.mxu0 %v2144
    %v2609 = vpop.f32.mrf.mxu0
    %v2610 = vadd.f32 %v2561, %v2609
    %v2611 = vpop.f32.mrf.mxu0
    %v2612 = vadd.f32 %v2563, %v2611
    %2613 = vmatmul.bf16.gmra.mxu0 %v2153
    %v2614 = vpop.f32.mrf.mxu0
    %v2615 = vadd.f32 %v2566, %v2614
    %v2616 = vpop.f32.mrf.mxu0
    %v2617 = vadd.f32 %v2568, %v2616
    %2618 = vmatmul.bf16.gmra.mxu0 %v2162
    %v2619 = vpop.f32.mrf.mxu0
    %v2620 = vadd.f32 %v2571, %v2619
    %v2621 = vpop.f32.mrf.mxu0
    %v2622 = vadd.f32 %v2573, %v2621
    %2623 = vmatmul.bf16.gmra.mxu0 %v2171
    %v2624 = vpop.f32.mrf.mxu0
    %v2625 = vadd.f32 %v2576, %v2624
    %v2626 = vpop.f32.mrf.mxu0
    %v2627 = vadd.f32 %v2578, %v2626
    %2628 = vmatmul.bf16.gmra.mxu0 %v2180
    %v2629 = vpop.f32.mrf.mxu0
    %v2630 = vadd.f32 %v2581, %v2629
    %v2631 = vpop.f32.mrf.mxu0
    %v2632 = vadd.f32 %v2583, %v2631
    %2633 = vmatmul.bf16.gmra.mxu0 %v2189
    %v2634 = vpop.f32.mrf.mxu0
    %v2635 = vadd.f32 %v2586, %v2634
    %v2636 = vpop.f32.mrf.mxu0
    %v2637 = vadd.f32 %v2588, %v2636
    %2638 = vmatmul.bf16.gmra.mxu0 %v2198
    %v2639 = vpop.f32.mrf.mxu0
    %v2640 = vadd.f32 %v2591, %v2639
    %v2641 = vpop.f32.mrf.mxu0
    %v2642 = vadd.f32 %v2593, %v2641
    %2643 = vmatmul.bf16.gmra.mxu0 %v2207
    %v2644 = vpop.f32.mrf.mxu0
    %v2645 = vadd.f32 %v2596, %v2644
    %v2646 = vpop.f32.mrf.mxu0
    %v2647 = vadd.f32 %v2598, %v2646
    %2648 = vdwg.mxu0
    %2649 = vmatpush.bf16.msra.mxu0 %v1830
    %2650 = vmatpush.bf16.msra.mxu0 %v1828
    %2651 = vmatpush.bf16.msra.mxu0 %v1826
    %2652 = vmatpush.bf16.msra.mxu0 %v1824
    %2653 = vmatpush.bf16.msra.mxu0 %v1822
    %2654 = vmatpush.bf16.msra.mxu0 %v1820
    %2655 = vmatpush.bf16.msra.mxu0 %v1818
    %2656 = vmatpush.bf16.msra.mxu0 %v1816
    %2657 = vmatmul.bf16.gmra.mxu0 %v2145
    %v2658 = vpop.f32.mrf.mxu0
    %v2659 = vadd.f32 %v2610, %v2658
    %v2660 = vpop.f32.mrf.mxu0
    %v2661 = vadd.f32 %v2612, %v2660
    %2662 = vmatmul.bf16.gmra.mxu0 %v2154
    %v2663 = vpop.f32.mrf.mxu0
    %v2664 = vadd.f32 %v2615, %v2663
    %v2665 = vpop.f32.mrf.mxu0
    %v2666 = vadd.f32 %v2617, %v2665
    %2667 = vmatmul.bf16.gmra.mxu0 %v2163
    %v2668 = vpop.f32.mrf.mxu0
    %v2669 = vadd.f32 %v2620, %v2668
    %v2670 = vpop.f32.mrf.mxu0
    %v2671 = vadd.f32 %v2622, %v2670
    %2672 = vmatmul.bf16.gmra.mxu0 %v2172
    %v2673 = vpop.f32.mrf.mxu0
    %v2674 = vadd.f32 %v2625, %v2673
    %v2675 = vpop.f32.mrf.mxu0
    %v2676 = vadd.f32 %v2627, %v2675
    %2677 = vmatmul.bf16.gmra.mxu0 %v2181
    %v2678 = vpop.f32.mrf.mxu0
    %v2679 = vadd.f32 %v2630, %v2678
    %v2680 = vpop.f32.mrf.mxu0
    %v2681 = vadd.f32 %v2632, %v2680
    %2682 = vmatmul.bf16.gmra.mxu0 %v2190
    %v2683 = vpop.f32.mrf.mxu0
    %v2684 = vadd.f32 %v2635, %v2683
    %v2685 = vpop.f32.mrf.mxu0
    %v2686 = vadd.f32 %v2637, %v2685
    %2687 = vmatmul.bf16.gmra.mxu0 %v2199
    %v2688 = vpop.f32.mrf.mxu0
    %v2689 = vadd.f32 %v2640, %v2688
    %v2690 = vpop.f32.mrf.mxu0
    %v2691 = vadd.f32 %v2642, %v2690
    %2692 = vmatmul.bf16.gmra.mxu0 %v2208
    %v2693 = vpop.f32.mrf.mxu0
    %v2694 = vadd.f32 %v2645, %v2693
    %v2695 = vpop.f32.mrf.mxu0
    %v2696 = vadd.f32 %v2647, %v2695
    %2697 = vdwg.mxu0
    %2698 = vmatpush.bf16.msra.mxu0 0
    %2699 = vmatpush.bf16.msra.mxu0 0
    %2700 = vmatpush.bf16.msra.mxu0 0
    %2701 = vmatpush.bf16.msra.mxu0 0
    %2702 = vmatpush.bf16.msra.mxu0 0
    %2703 = vmatpush.bf16.msra.mxu0 0
    %2704 = vmatpush.bf16.msra.mxu0 0
    %2705 = vmatpush.bf16.msra.mxu0 %v2301
    %2706 = vmatmul.bf16.gmra.mxu0 %v2276
    %v2707 = vpop.f32.mrf.mxu0
    %v2708 = vadd.f32 %v2659, %v2707
    %v2709 = vpop.f32.mrf.mxu0
    %v2710 = vadd.f32 %v2661, %v2709
    %2711 = vmatmul.bf16.gmra.mxu0 %v2279
    %v2712 = vpop.f32.mrf.mxu0
    %v2713 = vadd.f32 %v2664, %v2712
    %v2714 = vpop.f32.mrf.mxu0
    %v2715 = vadd.f32 %v2666, %v2714
    %2716 = vmatmul.bf16.gmra.mxu0 %v2282
    %v2717 = vpop.f32.mrf.mxu0
    %v2718 = vadd.f32 %v2669, %v2717
    %v2719 = vpop.f32.mrf.mxu0
    %v2720 = vadd.f32 %v2671, %v2719
    %2721 = vmatmul.bf16.gmra.mxu0 %v2285
    %v2722 = vpop.f32.mrf.mxu0
    %v2723 = vadd.f32 %v2674, %v2722
    %v2724 = vpop.f32.mrf.mxu0
    %v2725 = vadd.f32 %v2676, %v2724
    %2726 = vmatmul.bf16.gmra.mxu0 %v2288
    %v2727 = vpop.f32.mrf.mxu0
    %v2728 = vadd.f32 %v2679, %v2727
    %v2729 = vpop.f32.mrf.mxu0
    %v2730 = vadd.f32 %v2681, %v2729
    %2731 = vmatmul.bf16.gmra.mxu0 %v2291
    %v2732 = vpop.f32.mrf.mxu0
    %v2733 = vadd.f32 %v2684, %v2732
    %v2734 = vpop.f32.mrf.mxu0
    %v2735 = vadd.f32 %v2686, %v2734
    %2736 = vmatmul.bf16.gmra.mxu0 %v2294
    %v2737 = vpop.f32.mrf.mxu0
    %v2738 = vadd.f32 %v2689, %v2737
    %v2739 = vpop.f32.mrf.mxu0
    %v2740 = vadd.f32 %v2691, %v2739
    %2741 = vmatmul.bf16.gmra.mxu0 %v2297
    %v2742 = vpop.f32.mrf.mxu0
    %v2743 = vadd.f32 %v2694, %v2742
    %v2744 = vpop.f32.mrf.mxu0
    %v2745 = vadd.f32 %v2696, %v2744
    %2746 = vdwg.mxu0
    %2747 = vmatpush.bf16.msra.mxu0 %v1719
    %2748 = vmatpush.bf16.msra.mxu0 %v1717
    %2749 = vmatpush.bf16.msra.mxu0 %v1715
    %2750 = vmatpush.bf16.msra.mxu0 %v1713
    %2751 = vmatpush.bf16.msra.mxu0 %v1711
    %2752 = vmatpush.bf16.msra.mxu0 %v1709
    %2753 = vmatpush.bf16.msra.mxu0 %v1707
    %2754 = vmatpush.bf16.msra.mxu0 %v1705
    %2755 = vmatmul.bf16.gmra.mxu0 %v2138
    %v2756 = vpop.f32.mrf.mxu0
    %v2757 = vadd.f32 0.0, %v2756
    %v2758 = vpop.f32.mrf.mxu0
    %v2759 = vadd.f32 0.0, %v2758
    %2760 = vmatmul.bf16.gmra.mxu0 %v2147
    %v2761 = vpop.f32.mrf.mxu0
    %v2762 = vadd.f32 0.0, %v2761
    %v2763 = vpop.f32.mrf.mxu0
    %v2764 = vadd.f32 0.0, %v2763
    %2765 = vmatmul.bf16.gmra.mxu0 %v2156
    %v2766 = vpop.f32.mrf.mxu0
    %v2767 = vadd.f32 0.0, %v2766
    %v2768 = vpop.f32.mrf.mxu0
    %v2769 = vadd.f32 0.0, %v2768
    %2770 = vmatmul.bf16.gmra.mxu0 %v2165
    %v2771 = vpop.f32.mrf.mxu0
    %v2772 = vadd.f32 0.0, %v2771
    %v2773 = vpop.f32.mrf.mxu0
    %v2774 = vadd.f32 0.0, %v2773
    %2775 = vmatmul.bf16.gmra.mxu0 %v2174
    %v2776 = vpop.f32.mrf.mxu0
    %v2777 = vadd.f32 0.0, %v2776
    %v2778 = vpop.f32.mrf.mxu0
    %v2779 = vadd.f32 0.0, %v2778
    %2780 = vmatmul.bf16.gmra.mxu0 %v2183
    %v2781 = vpop.f32.mrf.mxu0
    %v2782 = vadd.f32 0.0, %v2781
    %v2783 = vpop.f32.mrf.mxu0
    %v2784 = vadd.f32 0.0, %v2783
    %2785 = vmatmul.bf16.gmra.mxu0 %v2192
    %v2786 = vpop.f32.mrf.mxu0
    %v2787 = vadd.f32 0.0, %v2786
    %v2788 = vpop.f32.mrf.mxu0
    %v2789 = vadd.f32 0.0, %v2788
    %2790 = vmatmul.bf16.gmra.mxu0 %v2201
    %v2791 = vpop.f32.mrf.mxu0
    %v2792 = vadd.f32 0.0, %v2791
    %v2793 = vpop.f32.mrf.mxu0
    %v2794 = vadd.f32 0.0, %v2793
    %2795 = vdwg.mxu0
    %2796 = vmatpush.bf16.msra.mxu0 %v1735
    %2797 = vmatpush.bf16.msra.mxu0 %v1733
    %2798 = vmatpush.bf16.msra.mxu0 %v1731
    %2799 = vmatpush.bf16.msra.mxu0 %v1729
    %2800 = vmatpush.bf16.msra.mxu0 %v1727
    %2801 = vmatpush.bf16.msra.mxu0 %v1725
    %2802 = vmatpush.bf16.msra.mxu0 %v1723
    %2803 = vmatpush.bf16.msra.mxu0 %v1721
    %2804 = vmatmul.bf16.gmra.mxu0 %v2139
    %v2805 = vpop.f32.mrf.mxu0
    %v2806 = vadd.f32 %v2757, %v2805
    %v2807 = vpop.f32.mrf.mxu0
    %v2808 = vadd.f32 %v2759, %v2807
    %2809 = vmatmul.bf16.gmra.mxu0 %v2148
    %v2810 = vpop.f32.mrf.mxu0
    %v2811 = vadd.f32 %v2762, %v2810
    %v2812 = vpop.f32.mrf.mxu0
    %v2813 = vadd.f32 %v2764, %v2812
    %2814 = vmatmul.bf16.gmra.mxu0 %v2157
    %v2815 = vpop.f32.mrf.mxu0
    %v2816 = vadd.f32 %v2767, %v2815
    %v2817 = vpop.f32.mrf.mxu0
    %v2818 = vadd.f32 %v2769, %v2817
    %2819 = vmatmul.bf16.gmra.mxu0 %v2166
    %v2820 = vpop.f32.mrf.mxu0
    %v2821 = vadd.f32 %v2772, %v2820
    %v2822 = vpop.f32.mrf.mxu0
    %v2823 = vadd.f32 %v2774, %v2822
    %2824 = vmatmul.bf16.gmra.mxu0 %v2175
    %v2825 = vpop.f32.mrf.mxu0
    %v2826 = vadd.f32 %v2777, %v2825
    %v2827 = vpop.f32.mrf.mxu0
    %v2828 = vadd.f32 %v2779, %v2827
    %2829 = vmatmul.bf16.gmra.mxu0 %v2184
    %v2830 = vpop.f32.mrf.mxu0
    %v2831 = vadd.f32 %v2782, %v2830
    %v2832 = vpop.f32.mrf.mxu0
    %v2833 = vadd.f32 %v2784, %v2832
    %2834 = vmatmul.bf16.gmra.mxu0 %v2193
    %v2835 = vpop.f32.mrf.mxu0
    %v2836 = vadd.f32 %v2787, %v2835
    %v2837 = vpop.f32.mrf.mxu0
    %v2838 = vadd.f32 %v2789, %v2837
    %2839 = vmatmul.bf16.gmra.mxu0 %v2202
    %v2840 = vpop.f32.mrf.mxu0
    %v2841 = vadd.f32 %v2792, %v2840
    %v2842 = vpop.f32.mrf.mxu0
    %v2843 = vadd.f32 %v2794, %v2842
    %2844 = vdwg.mxu0
    %2845 = vmatpush.bf16.msra.mxu0 %v1751
    %2846 = vmatpush.bf16.msra.mxu0 %v1749
    %2847 = vmatpush.bf16.msra.mxu0 %v1747
    %2848 = vmatpush.bf16.msra.mxu0 %v1745
    %2849 = vmatpush.bf16.msra.mxu0 %v1743
    %2850 = vmatpush.bf16.msra.mxu0 %v1741
    %2851 = vmatpush.bf16.msra.mxu0 %v1739
    %2852 = vmatpush.bf16.msra.mxu0 %v1737
    %2853 = vmatmul.bf16.gmra.mxu0 %v2140
    %v2854 = vpop.f32.mrf.mxu0
    %v2855 = vadd.f32 %v2806, %v2854
    %v2856 = vpop.f32.mrf.mxu0
    %v2857 = vadd.f32 %v2808, %v2856
    %2858 = vmatmul.bf16.gmra.mxu0 %v2149
    %v2859 = vpop.f32.mrf.mxu0
    %v2860 = vadd.f32 %v2811, %v2859
    %v2861 = vpop.f32.mrf.mxu0
    %v2862 = vadd.f32 %v2813, %v2861
    %2863 = vmatmul.bf16.gmra.mxu0 %v2158
    %v2864 = vpop.f32.mrf.mxu0
    %v2865 = vadd.f32 %v2816, %v2864
    %v2866 = vpop.f32.mrf.mxu0
    %v2867 = vadd.f32 %v2818, %v2866
    %2868 = vmatmul.bf16.gmra.mxu0 %v2167
    %v2869 = vpop.f32.mrf.mxu0
    %v2870 = vadd.f32 %v2821, %v2869
    %v2871 = vpop.f32.mrf.mxu0
    %v2872 = vadd.f32 %v2823, %v2871
    %2873 = vmatmul.bf16.gmra.mxu0 %v2176
    %v2874 = vpop.f32.mrf.mxu0
    %v2875 = vadd.f32 %v2826, %v2874
    %v2876 = vpop.f32.mrf.mxu0
    %v2877 = vadd.f32 %v2828, %v2876
    %2878 = vmatmul.bf16.gmra.mxu0 %v2185
    %v2879 = vpop.f32.mrf.mxu0
    %v2880 = vadd.f32 %v2831, %v2879
    %v2881 = vpop.f32.mrf.mxu0
    %v2882 = vadd.f32 %v2833, %v2881
    %2883 = vmatmul.bf16.gmra.mxu0 %v2194
    %v2884 = vpop.f32.mrf.mxu0
    %v2885 = vadd.f32 %v2836, %v2884
    %v2886 = vpop.f32.mrf.mxu0
    %v2887 = vadd.f32 %v2838, %v2886
    %2888 = vmatmul.bf16.gmra.mxu0 %v2203
    %v2889 = vpop.f32.mrf.mxu0
    %v2890 = vadd.f32 %v2841, %v2889
    %v2891 = vpop.f32.mrf.mxu0
    %v2892 = vadd.f32 %v2843, %v2891
    %2893 = vdwg.mxu0
    %2894 = vmatpush.bf16.msra.mxu0 %v1767
    %2895 = vmatpush.bf16.msra.mxu0 %v1765
    %2896 = vmatpush.bf16.msra.mxu0 %v1763
    %2897 = vmatpush.bf16.msra.mxu0 %v1761
    %2898 = vmatpush.bf16.msra.mxu0 %v1759
    %2899 = vmatpush.bf16.msra.mxu0 %v1757
    %2900 = vmatpush.bf16.msra.mxu0 %v1755
    %2901 = vmatpush.bf16.msra.mxu0 %v1753
    %2902 = vmatmul.bf16.gmra.mxu0 %v2141
    %v2903 = vpop.f32.mrf.mxu0
    %v2904 = vadd.f32 %v2855, %v2903
    %v2905 = vpop.f32.mrf.mxu0
    %v2906 = vadd.f32 %v2857, %v2905
    %2907 = vmatmul.bf16.gmra.mxu0 %v2150
    %v2908 = vpop.f32.mrf.mxu0
    %v2909 = vadd.f32 %v2860, %v2908
    %v2910 = vpop.f32.mrf.mxu0
    %v2911 = vadd.f32 %v2862, %v2910
    %2912 = vmatmul.bf16.gmra.mxu0 %v2159
    %v2913 = vpop.f32.mrf.mxu0
    %v2914 = vadd.f32 %v2865, %v2913
    %v2915 = vpop.f32.mrf.mxu0
    %v2916 = vadd.f32 %v2867, %v2915
    %2917 = vmatmul.bf16.gmra.mxu0 %v2168
    %v2918 = vpop.f32.mrf.mxu0
    %v2919 = vadd.f32 %v2870, %v2918
    %v2920 = vpop.f32.mrf.mxu0
    %v2921 = vadd.f32 %v2872, %v2920
    %2922 = vmatmul.bf16.gmra.mxu0 %v2177
    %v2923 = vpop.f32.mrf.mxu0
    %v2924 = vadd.f32 %v2875, %v2923
    %v2925 = vpop.f32.mrf.mxu0
    %v2926 = vadd.f32 %v2877, %v2925
    %2927 = vmatmul.bf16.gmra.mxu0 %v2186
    %v2928 = vpop.f32.mrf.mxu0
    %v2929 = vadd.f32 %v2880, %v2928
    %v2930 = vpop.f32.mrf.mxu0
    %v2931 = vadd.f32 %v2882, %v2930
    %2932 = vmatmul.bf16.gmra.mxu0 %v2195
    %v2933 = vpop.f32.mrf.mxu0
    %v2934 = vadd.f32 %v2885, %v2933
    %v2935 = vpop.f32.mrf.mxu0
    %v2936 = vadd.f32 %v2887, %v2935
    %2937 = vmatmul.bf16.gmra.mxu0 %v2204
    %v2938 = vpop.f32.mrf.mxu0
    %v2939 = vadd.f32 %v2890, %v2938
    %v2940 = vpop.f32.mrf.mxu0
    %v2941 = vadd.f32 %v2892, %v2940
    %2942 = vdwg.mxu0
    %2943 = vmatpush.bf16.msra.mxu0 %v1783
    %2944 = vmatpush.bf16.msra.mxu0 %v1781
    %2945 = vmatpush.bf16.msra.mxu0 %v1779
    %2946 = vmatpush.bf16.msra.mxu0 %v1777
    %2947 = vmatpush.bf16.msra.mxu0 %v1775
    %2948 = vmatpush.bf16.msra.mxu0 %v1773
    %2949 = vmatpush.bf16.msra.mxu0 %v1771
    %2950 = vmatpush.bf16.msra.mxu0 %v1769
    %2951 = vmatmul.bf16.gmra.mxu0 %v2142
    %v2952 = vpop.f32.mrf.mxu0
    %v2953 = vadd.f32 %v2904, %v2952
    %v2954 = vpop.f32.mrf.mxu0
    %v2955 = vadd.f32 %v2906, %v2954
    %2956 = vmatmul.bf16.gmra.mxu0 %v2151
    %v2957 = vpop.f32.mrf.mxu0
    %v2958 = vadd.f32 %v2909, %v2957
    %v2959 = vpop.f32.mrf.mxu0
    %v2960 = vadd.f32 %v2911, %v2959
    %2961 = vmatmul.bf16.gmra.mxu0 %v2160
    %v2962 = vpop.f32.mrf.mxu0
    %v2963 = vadd.f32 %v2914, %v2962
    %v2964 = vpop.f32.mrf.mxu0
    %v2965 = vadd.f32 %v2916, %v2964
    %2966 = vmatmul.bf16.gmra.mxu0 %v2169
    %v2967 = vpop.f32.mrf.mxu0
    %v2968 = vadd.f32 %v2919, %v2967
    %v2969 = vpop.f32.mrf.mxu0
    %v2970 = vadd.f32 %v2921, %v2969
    %2971 = vmatmul.bf16.gmra.mxu0 %v2178
    %v2972 = vpop.f32.mrf.mxu0
    %v2973 = vadd.f32 %v2924, %v2972
    %v2974 = vpop.f32.mrf.mxu0
    %v2975 = vadd.f32 %v2926, %v2974
    %2976 = vmatmul.bf16.gmra.mxu0 %v2187
    %v2977 = vpop.f32.mrf.mxu0
    %v2978 = vadd.f32 %v2929, %v2977
    %v2979 = vpop.f32.mrf.mxu0
    %v2980 = vadd.f32 %v2931, %v2979
    %2981 = vmatmul.bf16.gmra.mxu0 %v2196
    %v2982 = vpop.f32.mrf.mxu0
    %v2983 = vadd.f32 %v2934, %v2982
    %v2984 = vpop.f32.mrf.mxu0
    %v2985 = vadd.f32 %v2936, %v2984
    %2986 = vmatmul.bf16.gmra.mxu0 %v2205
    %v2987 = vpop.f32.mrf.mxu0
    %v2988 = vadd.f32 %v2939, %v2987
    %v2989 = vpop.f32.mrf.mxu0
    %v2990 = vadd.f32 %v2941, %v2989
    %2991 = vdwg.mxu0
    %2992 = vmatpush.bf16.msra.mxu0 %v1799
    %2993 = vmatpush.bf16.msra.mxu0 %v1797
    %2994 = vmatpush.bf16.msra.mxu0 %v1795
    %2995 = vmatpush.bf16.msra.mxu0 %v1793
    %2996 = vmatpush.bf16.msra.mxu0 %v1791
    %2997 = vmatpush.bf16.msra.mxu0 %v1789
    %2998 = vmatpush.bf16.msra.mxu0 %v1787
    %2999 = vmatpush.bf16.msra.mxu0 %v1785
    %3000 = vmatmul.bf16.gmra.mxu0 %v2143
    %v3001 = vpop.f32.mrf.mxu0
    %v3002 = vadd.f32 %v2953, %v3001
    %v3003 = vpop.f32.mrf.mxu0
    %v3004 = vadd.f32 %v2955, %v3003
    %3005 = vmatmul.bf16.gmra.mxu0 %v2152
    %v3006 = vpop.f32.mrf.mxu0
    %v3007 = vadd.f32 %v2958, %v3006
    %v3008 = vpop.f32.mrf.mxu0
    %v3009 = vadd.f32 %v2960, %v3008
    %3010 = vmatmul.bf16.gmra.mxu0 %v2161
    %v3011 = vpop.f32.mrf.mxu0
    %v3012 = vadd.f32 %v2963, %v3011
    %v3013 = vpop.f32.mrf.mxu0
    %v3014 = vadd.f32 %v2965, %v3013
    %3015 = vmatmul.bf16.gmra.mxu0 %v2170
    %v3016 = vpop.f32.mrf.mxu0
    %v3017 = vadd.f32 %v2968, %v3016
    %v3018 = vpop.f32.mrf.mxu0
    %v3019 = vadd.f32 %v2970, %v3018
    %3020 = vmatmul.bf16.gmra.mxu0 %v2179
    %v3021 = vpop.f32.mrf.mxu0
    %v3022 = vadd.f32 %v2973, %v3021
    %v3023 = vpop.f32.mrf.mxu0
    %v3024 = vadd.f32 %v2975, %v3023
    %3025 = vmatmul.bf16.gmra.mxu0 %v2188
    %v3026 = vpop.f32.mrf.mxu0
    %v3027 = vadd.f32 %v2978, %v3026
    %v3028 = vpop.f32.mrf.mxu0
    %v3029 = vadd.f32 %v2980, %v3028
    %3030 = vmatmul.bf16.gmra.mxu0 %v2197
    %v3031 = vpop.f32.mrf.mxu0
    %v3032 = vadd.f32 %v2983, %v3031
    %v3033 = vpop.f32.mrf.mxu0
    %v3034 = vadd.f32 %v2985, %v3033
    %3035 = vmatmul.bf16.gmra.mxu0 %v2206
    %v3036 = vpop.f32.mrf.mxu0
    %v3037 = vadd.f32 %v2988, %v3036
    %v3038 = vpop.f32.mrf.mxu0
    %v3039 = vadd.f32 %v2990, %v3038
    %3040 = vdwg.mxu0
    %3041 = vmatpush.bf16.msra.mxu0 %v1815
    %3042 = vmatpush.bf16.msra.mxu0 %v1813
    %3043 = vmatpush.bf16.msra.mxu0 %v1811
    %3044 = vmatpush.bf16.msra.mxu0 %v1809
    %3045 = vmatpush.bf16.msra.mxu0 %v1807
    %3046 = vmatpush.bf16.msra.mxu0 %v1805
    %3047 = vmatpush.bf16.msra.mxu0 %v1803
    %3048 = vmatpush.bf16.msra.mxu0 %v1801
    %3049 = vmatmul.bf16.gmra.mxu0 %v2144
    %v3050 = vpop.f32.mrf.mxu0
    %v3051 = vadd.f32 %v3002, %v3050
    %v3052 = vpop.f32.mrf.mxu0
    %v3053 = vadd.f32 %v3004, %v3052
    %3054 = vmatmul.bf16.gmra.mxu0 %v2153
    %v3055 = vpop.f32.mrf.mxu0
    %v3056 = vadd.f32 %v3007, %v3055
    %v3057 = vpop.f32.mrf.mxu0
    %v3058 = vadd.f32 %v3009, %v3057
    %3059 = vmatmul.bf16.gmra.mxu0 %v2162
    %v3060 = vpop.f32.mrf.mxu0
    %v3061 = vadd.f32 %v3012, %v3060
    %v3062 = vpop.f32.mrf.mxu0
    %v3063 = vadd.f32 %v3014, %v3062
    %3064 = vmatmul.bf16.gmra.mxu0 %v2171
    %v3065 = vpop.f32.mrf.mxu0
    %v3066 = vadd.f32 %v3017, %v3065
    %v3067 = vpop.f32.mrf.mxu0
    %v3068 = vadd.f32 %v3019, %v3067
    %3069 = vmatmul.bf16.gmra.mxu0 %v2180
    %v3070 = vpop.f32.mrf.mxu0
    %v3071 = vadd.f32 %v3022, %v3070
    %v3072 = vpop.f32.mrf.mxu0
    %v3073 = vadd.f32 %v3024, %v3072
    %3074 = vmatmul.bf16.gmra.mxu0 %v2189
    %v3075 = vpop.f32.mrf.mxu0
    %v3076 = vadd.f32 %v3027, %v3075
    %v3077 = vpop.f32.mrf.mxu0
    %v3078 = vadd.f32 %v3029, %v3077
    %3079 = vmatmul.bf16.gmra.mxu0 %v2198
    %v3080 = vpop.f32.mrf.mxu0
    %v3081 = vadd.f32 %v3032, %v3080
    %v3082 = vpop.f32.mrf.mxu0
    %v3083 = vadd.f32 %v3034, %v3082
    %3084 = vmatmul.bf16.gmra.mxu0 %v2207
    %v3085 = vpop.f32.mrf.mxu0
    %v3086 = vadd.f32 %v3037, %v3085
    %v3087 = vpop.f32.mrf.mxu0
    %v3088 = vadd.f32 %v3039, %v3087
    %3089 = vdwg.mxu0
    %3090 = vmatpush.bf16.msra.mxu0 %v1831
    %3091 = vmatpush.bf16.msra.mxu0 %v1829
    %3092 = vmatpush.bf16.msra.mxu0 %v1827
    %3093 = vmatpush.bf16.msra.mxu0 %v1825
    %3094 = vmatpush.bf16.msra.mxu0 %v1823
    %3095 = vmatpush.bf16.msra.mxu0 %v1821
    %3096 = vmatpush.bf16.msra.mxu0 %v1819
    %3097 = vmatpush.bf16.msra.mxu0 %v1817
    %3098 = vmatmul.bf16.gmra.mxu0 %v2145
    %v3099 = vpop.f32.mrf.mxu0
    %v3100 = vadd.f32 %v3051, %v3099
    %v3101 = vpop.f32.mrf.mxu0
    %v3102 = vadd.f32 %v3053, %v3101
    %3103 = vmatmul.bf16.gmra.mxu0 %v2154
    %v3104 = vpop.f32.mrf.mxu0
    %v3105 = vadd.f32 %v3056, %v3104
    %v3106 = vpop.f32.mrf.mxu0
    %v3107 = vadd.f32 %v3058, %v3106
    %3108 = vmatmul.bf16.gmra.mxu0 %v2163
    %v3109 = vpop.f32.mrf.mxu0
    %v3110 = vadd.f32 %v3061, %v3109
    %v3111 = vpop.f32.mrf.mxu0
    %v3112 = vadd.f32 %v3063, %v3111
    %3113 = vmatmul.bf16.gmra.mxu0 %v2172
    %v3114 = vpop.f32.mrf.mxu0
    %v3115 = vadd.f32 %v3066, %v3114
    %v3116 = vpop.f32.mrf.mxu0
    %v3117 = vadd.f32 %v3068, %v3116
    %3118 = vmatmul.bf16.gmra.mxu0 %v2181
    %v3119 = vpop.f32.mrf.mxu0
    %v3120 = vadd.f32 %v3071, %v3119
    %v3121 = vpop.f32.mrf.mxu0
    %v3122 = vadd.f32 %v3073, %v3121
    %3123 = vmatmul.bf16.gmra.mxu0 %v2190
    %v3124 = vpop.f32.mrf.mxu0
    %v3125 = vadd.f32 %v3076, %v3124
    %v3126 = vpop.f32.mrf.mxu0
    %v3127 = vadd.f32 %v3078, %v3126
    %3128 = vmatmul.bf16.gmra.mxu0 %v2199
    %v3129 = vpop.f32.mrf.mxu0
    %v3130 = vadd.f32 %v3081, %v3129
    %v3131 = vpop.f32.mrf.mxu0
    %v3132 = vadd.f32 %v3083, %v3131
    %3133 = vmatmul.bf16.gmra.mxu0 %v2208
    %v3134 = vpop.f32.mrf.mxu0
    %v3135 = vadd.f32 %v3086, %v3134
    %v3136 = vpop.f32.mrf.mxu0
    %v3137 = vadd.f32 %v3088, %v3136
    %3138 = vdwg.mxu0
    %3139 = vmatpush.bf16.msra.mxu0 0
    %3140 = vmatpush.bf16.msra.mxu0 0
    %3141 = vmatpush.bf16.msra.mxu0 0
    %3142 = vmatpush.bf16.msra.mxu0 0
    %3143 = vmatpush.bf16.msra.mxu0 0
    %3144 = vmatpush.bf16.msra.mxu0 0
    %3145 = vmatpush.bf16.msra.mxu0 0
    %3146 = vmatpush.bf16.msra.mxu0 %v2304
    %3147 = vmatmul.bf16.gmra.mxu0 %v2276
    %v3148 = vpop.f32.mrf.mxu0
    %v3149 = vadd.f32 %v3100, %v3148
    %v3150 = vpop.f32.mrf.mxu0
    %v3151 = vadd.f32 %v3102, %v3150
    %3152 = vmatmul.bf16.gmra.mxu0 %v2279
    %v3153 = vpop.f32.mrf.mxu0
    %v3154 = vadd.f32 %v3105, %v3153
    %v3155 = vpop.f32.mrf.mxu0
    %v3156 = vadd.f32 %v3107, %v3155
    %3157 = vmatmul.bf16.gmra.mxu0 %v2282
    %v3158 = vpop.f32.mrf.mxu0
    %v3159 = vadd.f32 %v3110, %v3158
    %v3160 = vpop.f32.mrf.mxu0
    %v3161 = vadd.f32 %v3112, %v3160
    %3162 = vmatmul.bf16.gmra.mxu0 %v2285
    %v3163 = vpop.f32.mrf.mxu0
    %v3164 = vadd.f32 %v3115, %v3163
    %v3165 = vpop.f32.mrf.mxu0
    %v3166 = vadd.f32 %v3117, %v3165
    %3167 = vmatmul.bf16.gmra.mxu0 %v2288
    %v3168 = vpop.f32.mrf.mxu0
    %v3169 = vadd.f32 %v3120, %v3168
    %v3170 = vpop.f32.mrf.mxu0
    %v3171 = vadd.f32 %v3122, %v3170
    %3172 = vmatmul.bf16.gmra.mxu0 %v2291
    %v3173 = vpop.f32.mrf.mxu0
    %v3174 = vadd.f32 %v3125, %v3173
    %v3175 = vpop.f32.mrf.mxu0
    %v3176 = vadd.f32 %v3127, %v3175
    %3177 = vmatmul.bf16.gmra.mxu0 %v2294
    %v3178 = vpop.f32.mrf.mxu0
    %v3179 = vadd.f32 %v3130, %v3178
    %v3180 = vpop.f32.mrf.mxu0
    %v3181 = vadd.f32 %v3132, %v3180
    %3182 = vmatmul.bf16.gmra.mxu0 %v2297
    %v3183 = vpop.f32.mrf.mxu0
    %v3184 = vadd.f32 %v3135, %v3183
    %v3185 = vpop.f32.mrf.mxu0
    %v3186 = vadd.f32 %v3137, %v3185
    %3187 = vdwg.mxu0
    %v3188 = vmax.f32 %v2708, 0.0
    %v3189 = vmax.f32 %v3149, 0.0
    %v3190 = vmax.f32 %v2710, 0.0
    %v3191 = vmax.f32 %v3151, 0.0
    %v3192 = vmax.f32 %v2713, 0.0
    %v3193 = vmax.f32 %v3154, 0.0
    %v3194 = vmax.f32 %v2715, 0.0
    %v3195 = vmax.f32 %v3156, 0.0
    %v3196 = vmax.f32 %v2718, 0.0
    %v3197 = vmax.f32 %v3159, 0.0
    %v3198 = vmax.f32 %v2720, 0.0
    %v3199 = vmax.f32 %v3161, 0.0
    %v3200 = vmax.f32 %v2723, 0.0
    %v3201 = vmax.f32 %v3164, 0.0
    %v3202 = vmax.f32 %v2725, 0.0
    %v3203 = vmax.f32 %v3166, 0.0
    %v3204 = vmax.f32 %v2728, 0.0
    %v3205 = vmax.f32 %v3169, 0.0
    %v3206 = vmax.f32 %v2730, 0.0
    %v3207 = vmax.f32 %v3171, 0.0
    %v3208 = vmax.f32 %v2733, 0.0
    %v3209 = vmax.f32 %v3174, 0.0
    %v3210 = vmax.f32 %v2735, 0.0
    %v3211 = vmax.f32 %v3176, 0.0
    %v3212 = vmax.f32 %v2738, 0.0
    %v3213 = vmax.f32 %v3179, 0.0
    %v3214 = vmax.f32 %v2740, 0.0
    %v3215 = vmax.f32 %v3181, 0.0
    %v3216 = vmax.f32 %v2743, 0.0
    %v3217 = vmax.f32 %v3184, 0.0
    %v3218 = vmax.f32 %v2745, 0.0
    %v3219 = vmax.f32 %v3186, 0.0
    %v3221 = vperm.slane %v41, 0
    %v3222 = vperm.slane %v41, 1
    %3225 = vmatpush.msra.mxu0 %v3218
    %3226 = vmatpush.msra.mxu0 %v3216
    %3227 = vmatpush.msra.mxu0 %v3214
    %3228 = vmatpush.msra.mxu0 %v3212
    %3229 = vmatpush.msra.mxu0 %v3210
    %3230 = vmatpush.msra.mxu0 %v3208
    %3231 = vmatpush.msra.mxu0 %v3206
    %3232 = vmatpush.msra.mxu0 %v3204
    %3233 = vmatpush.msra.mxu0 %v3202
    %3234 = vmatpush.msra.mxu0 %v3200
    %3235 = vmatpush.msra.mxu0 %v3198
    %3236 = vmatpush.msra.mxu0 %v3196
    %3237 = vmatpush.msra.mxu0 %v3194
    %3238 = vmatpush.msra.mxu0 %v3192
    %3239 = vmatpush.msra.mxu0 %v3190
    %3240 = vmatpush.msra.mxu0 %v3188
    %3241 = vmatmul.f32.gmra.mxu0 %v39
    %v3242 = vpop.f32.mrf.mxu0
    %v3243 = vadd.f32 %v3221, %v3242
    %3244 = vdwg.mxu0
    %3245 = vmatpush.msra.mxu0 %v3219
    %3246 = vmatpush.msra.mxu0 %v3217
    %3247 = vmatpush.msra.mxu0 %v3215
    %3248 = vmatpush.msra.mxu0 %v3213
    %3249 = vmatpush.msra.mxu0 %v3211
    %3250 = vmatpush.msra.mxu0 %v3209
    %3251 = vmatpush.msra.mxu0 %v3207
    %3252 = vmatpush.msra.mxu0 %v3205
    %3253 = vmatpush.msra.mxu0 %v3203
    %3254 = vmatpush.msra.mxu0 %v3201
    %3255 = vmatpush.msra.mxu0 %v3199
    %3256 = vmatpush.msra.mxu0 %v3197
    %3257 = vmatpush.msra.mxu0 %v3195
    %3258 = vmatpush.msra.mxu0 %v3193
    %3259 = vmatpush.msra.mxu0 %v3191
    %3260 = vmatpush.msra.mxu0 %v3189
    %3261 = vmatmul.f32.gmra.mxu0 %v39
    %v3262 = vpop.f32.mrf.mxu0
    %v3263 = vadd.f32 %v3222, %v3262
    %3264 = vdwg.mxu0
    %v3267 = vrot.slane %v3263, 7
    %vm3268 = vcmask 1040384
    %v3269 = vsel %vm3268, %v3243, %v3267
    %v3271 = vlaneseq
    %vm3272 = vcmp.ge.s32.totalorder %v3271, 0
    %vm3273 = vcmp.lt.s32.totalorder %v3271, 200
    %vm3274 = vmand %vm3272, %vm3273
    %3275 = vst.msk [vmem:[#allocation5] sm:$0x3] %vm3274, %v3269
    // Predicated region
    $region22: #{critic_forward.1} parent=1 // pred_check
      _
    $region23: #{critic_forward.1} parent=1 // pred_check_branch
      %3277 = sbr.rel (0) target = $region25
    $region24: #{critic_forward.1} parent=1 // pred_region
      %3279 = vsyncadd [#allocation3], 0
      %s3281 = sshll.u32 [#allocation5], 4
      %s3282 = int_to_ptr.vmem [resolvable:$true] %s3281
      %s3283 = sshll.u32 %s4, 4
      %s3284 = int_to_ptr.hbm [resolvable:$true] %s3283
      %3286 = dma.vmem_to_hbm [thread:$0]  %s3282, 32, %s3284, [#allocation3]
    $region25: #{critic_forward.1} parent=1 // pred_fallthru
      _
    // Predicated region
    $region26: #{critic_forward.1} parent=1 // pred_check
      _
    $region27: #{critic_forward.1} parent=1 // pred_check_branch
      %3288 = sbr.rel (0) target = $region29
    $region28: #{critic_forward.1} parent=1 // pred_region
      %3290 = dma.done [#allocation3], 32
    $region29: #{critic_forward.1} parent=1 // pred_fallthru
      _
    %3291 = vsyncpa [#allocation3], 1
    %3292 = vsyncpa [#allocation4], 1

</llo_original>
